<compile_context>
chip_gen: v7x
topology: tpu7x:2x2x1
jax: 0.10.0
libtpu: 0.0.40
codegen_flags: <defaults>
</compile_context>

<pallas_src>
import jax
import jax.numpy as jnp
from jax import lax
from jax.experimental import pallas as pl
from jax.experimental.pallas import tpu as pltpu

EPS_NORM = 1e-12  # F.normalize default eps
EPS_BN = 1e-5     # nn.BatchNorm2d default eps


def gat_kernel(zf_ref, mask_ref, xf_ref,
               wz_ref, wx_ref,
               gf_sh_ref, gb_sh_ref, xg_sh_ref,
               wfif_ref, wfib_ref, wfix_ref, fi_sh_ref,
               out_ref,
               lhs_ref, rhs_ref):
    C = xf_ref.shape[1]
    Nz = zf_ref.shape[2]

    zf = zf_ref[0]        # (C, Nz)   bf16
    mask = mask_ref[0]    # (1, Nz)   f32 (0/1 or fractional)
    xf = xf_ref[0]        # (C, TNx)  bf16

    def normalize_cols(x):
        # F.normalize(dim=channel): per-position L2 norm over channels (axis 0).
        ssq = jnp.sum(x * x, axis=0, keepdims=True)
        return x * lax.rsqrt(jnp.maximum(ssq, EPS_NORM * EPS_NORM))

    # ---- search-side projections: one stacked matmul [Wq_f;Wq_b;Wxg*sc] @ xf.
    xproj = jnp.dot(wx_ref[...], xf, preferred_element_type=jnp.float32)     # (3C, TNx)
    qn_f = normalize_cols(xproj[0:C]).astype(jnp.bfloat16)
    qn_b = normalize_cols(xproj[C:2 * C]).astype(jnp.bfloat16)
    xg = jnp.maximum(xproj[2 * C:3 * C] + xg_sh_ref[...], 0.0)               # (C, TNx) f32

    # ---- template-side projections: one stacked matmul, mask applied AFTER
    #      the matmul in f32 (exact:  W @ (z*m) == (W@z)*m  per position).
    zproj = jnp.dot(wz_ref[...], zf, preferred_element_type=jnp.float32)     # (4C, Nz)
    zp_f = zproj[0:2 * C] * mask
    zp_b = zproj[2 * C:4 * C] * (1.0 - mask)

    def side(zp, g_sh_ref, wfi_ref, qn):
        sn = normalize_cols(zp[0:C]).astype(jnp.bfloat16)                    # (C, Nz)
        g = jnp.maximum(zp[C:2 * C] + g_sh_ref[...], 0.0).astype(jnp.bfloat16)
        # sim^T[m, n] = <sn[:, m], qn[:, n]>  -- contract channel axis of both
        # operands directly (no explicit transpose).
        sim_t = lax.dot_general(sn, qn, (((0,), (0,)), ((), ())),
                                preferred_element_type=jnp.float32)          # (Nz, TNx)
        # fi restructure: Wfi_g @ (g @ sim^T) == (Wfi_g @ g) @ sim^T
        a = jnp.dot(wfi_ref[...], g, preferred_element_type=jnp.float32)     # (Cout, Nz)
        return a.astype(jnp.bfloat16), sim_t.astype(jnp.bfloat16)

    a_f, sim_t_f = side(zp_f, gf_sh_ref, wfif_ref, qn_f)
    a_b, sim_t_b = side(zp_b, gb_sh_ref, wfib_ref, qn_b)

    # ---- single deep-K output matmul: [a_f | a_b | Wfi_x] @ [sim^T_f ; sim^T_b ; xg]
    lhs_ref[:, 0:Nz] = a_f
    lhs_ref[:, Nz:2 * Nz] = a_b
    lhs_ref[:, 2 * Nz:] = wfix_ref[...]
    rhs_ref[0:Nz, :] = sim_t_f
    rhs_ref[Nz:2 * Nz, :] = sim_t_b
    rhs_ref[2 * Nz:, :] = xg.astype(jnp.bfloat16)

    out = jnp.dot(lhs_ref[...], rhs_ref[...], preferred_element_type=jnp.float32)
    out_ref[0] = jnp.maximum(out + fi_sh_ref[...], 0.0)                      # (Cout, TNx)


def _fold_bn(bias, gamma, beta, mean, var):
    scale = gamma / jnp.sqrt(var + EPS_BN)
    shift = beta - mean * scale + bias * scale
    return scale, shift


def _round_up(x, m):
    return ((x + m - 1) // m) * m


def _pick_nx_tile(n, pref=512):
    # n is a multiple of 128; pick the 128-multiple divisor of n closest to
    # `pref` (ties -> larger), so realistic sizes get 1-2 tiles without
    # excessive recompute of the z-side work.
    cands = [t for t in range(128, n + 1, 128) if n % t == 0]
    return min(cands, key=lambda t: (abs(t - pref), -t))


def graph_attention_union(zf, xf, zf_mask, p, *, nx_tile_pref=512):
    """zf: (B,C,Hz,Wz), xf: (B,C,Hx,Wx), zf_mask: (B,1,Hz,Wz). Returns (B,Cout,Hx,Wx)."""
    B, C, Hz, Wz = zf.shape
    _, _, Hx, Wx = xf.shape
    Nz, Nx = Hz * Wz, Hx * Wx
    Cout = p['fi_w'].shape[0]

    Nz_pad = _round_up(Nz, 128)
    Nx_pad = _round_up(Nx, 128)
    TNx = _pick_nx_tile(Nx_pad, nx_tile_pref)
    NJ = Nx_pad // TNx
    K_stk = 2 * Nz_pad + C

    # NCHW -> (B, C, N): pure reshape + zero padding, no transpose.
    zf_cn = jnp.pad(zf.reshape(B, C, Nz).astype(jnp.bfloat16),
                    ((0, 0), (0, 0), (0, Nz_pad - Nz)))
    xf_cn = jnp.pad(xf.reshape(B, C, Nx).astype(jnp.bfloat16),
                    ((0, 0), (0, 0), (0, Nx_pad - Nx)))
    mask_cn = jnp.pad(zf_mask.reshape(B, 1, Nz).astype(jnp.float32),
                      ((0, 0), (0, 0), (0, Nz_pad - Nz)))

    # Fold BN scale into the conv weights; only the shifts go into the kernel.
    fg_sc, fg_sh = _fold_bn(p['fore_g_b'], p['fore_g_gamma'], p['fore_g_beta'],
                            p['fore_g_mean'], p['fore_g_var'])
    bg_sc, bg_sh = _fold_bn(p['back_g_b'], p['back_g_gamma'], p['back_g_beta'],
                            p['back_g_mean'], p['back_g_var'])
    xg_sc, xg_sh = _fold_bn(p['xf_g_b'], p['xf_g_gamma'], p['xf_g_beta'],
                            p['xf_g_mean'], p['xf_g_var'])
    fi_sc, fi_sh = _fold_bn(p['fi_b'], p['fi_gamma'], p['fi_beta'],
                            p['fi_mean'], p['fi_var'])

    # Stack every weight that shares a RHS: one (4C,C) template matmul,
    # one (3C,C) search matmul.
    wz = jnp.concatenate(
        [p['fore_support_w'], p['fore_g_w'] * fg_sc[:, None],
         p['back_support_w'], p['back_g_w'] * bg_sc[:, None]],
        axis=0).astype(jnp.bfloat16)                                   # (4C, C)
    wx = jnp.concatenate(
        [p['fore_query_w'], p['back_query_w'], p['xf_g_w'] * xg_sc[:, None]],
        axis=0).astype(jnp.bfloat16)                                   # (3C, C)

    wfi_scaled = p['fi_w'] * fi_sc[:, None]
    wfi_f = wfi_scaled[:, 0 * C:1 * C].astype(jnp.bfloat16)
    wfi_b = wfi_scaled[:, 1 * C:2 * C].astype(jnp.bfloat16)
    wfi_x = wfi_scaled[:, 2 * C:3 * C].astype(jnp.bfloat16)

    in_specs = [
        pl.BlockSpec((1, C, Nz_pad), lambda b, j: (b, 0, 0)),   # zf
        pl.BlockSpec((1, 1, Nz_pad), lambda b, j: (b, 0, 0)),   # mask (f32)
        pl.BlockSpec((1, C, TNx),    lambda b, j: (b, 0, j)),   # xf (Nx-tiled)
        pl.BlockSpec((4 * C, C),     lambda b, j: (0, 0)),      # [Ws_f;Wg_f*sc;Ws_b;Wg_b*sc]
        pl.BlockSpec((3 * C, C),     lambda b, j: (0, 0)),      # [Wq_f;Wq_b;Wxg*sc]
        pl.BlockSpec((C, 1),         lambda b, j: (0, 0)),      # fore g shift
        pl.BlockSpec((C, 1),         lambda b, j: (0, 0)),      # back g shift
        pl.BlockSpec((C, 1),         lambda b, j: (0, 0)),      # xg shift
        pl.BlockSpec((Cout, C),      lambda b, j: (0, 0)),      # Wfi fore chunk (scaled)
        pl.BlockSpec((Cout, C),      lambda b, j: (0, 0)),      # Wfi back chunk (scaled)
        pl.BlockSpec((Cout, C),      lambda b, j: (0, 0)),      # Wfi xg chunk (scaled)
        pl.BlockSpec((Cout, 1),      lambda b, j: (0, 0)),      # fi shift
    ]
    out_spec = pl.BlockSpec((1, Cout, TNx), lambda b, j: (b, 0, j))

    out_cn = pl.pallas_call(
        gat_kernel,
        out_shape=jax.ShapeDtypeStruct((B, Cout, Nx_pad), jnp.float32),
        grid_spec=pltpu.PrefetchScalarGridSpec(
            num_scalar_prefetch=0,
            grid=(B, NJ),
            in_specs=in_specs,
            out_specs=out_spec,
            scratch_shapes=[pltpu.VMEM((Cout, K_stk), jnp.bfloat16),    # stacked LHS
                            pltpu.VMEM((K_stk, TNx), jnp.bfloat16)]),   # stacked RHS
        compiler_params=pltpu.CompilerParams(
            dimension_semantics=("parallel", "parallel")),
    )(zf_cn, mask_cn, xf_cn,
      wz, wx,
      fg_sh.reshape(C, 1), bg_sh.reshape(C, 1), xg_sh.reshape(C, 1),
      wfi_f, wfi_b, wfi_x, fi_sh.reshape(Cout, 1))

    # Drop padded (garbage) Nx columns, then pure reshape back to NCHW.
    return out_cn[:, :, :Nx].reshape(B, Cout, Hx, Wx)


# ----------------------- deterministic parameter init -----------------------
def init_params(key, C, Cout):
    ks = jax.random.split(key, 32)
    it = iter(ks)

    def nrm(shape, scale=0.1):
        return jax.random.normal(next(it), shape, jnp.float32) * scale

    p = {}
    for prefix in ('fore', 'back'):
        p[prefix + '_support_w'] = nrm((C, C))
        p[prefix + '_query_w'] = nrm((C, C))
        p[prefix + '_g_w'] = nrm((C, C))
        p[prefix + '_g_b'] = nrm((C,))
        p[prefix + '_g_gamma'] = 1.0 + nrm((C,))
        p[prefix + '_g_beta'] = nrm((C,))
        p[prefix + '_g_mean'] = nrm((C,))
        p[prefix + '_g_var'] = jnp.abs(nrm((C,))) + 1.0
    p['xf_g_w'] = nrm((C, C))
    p['xf_g_b'] = nrm((C,))
    p['xf_g_gamma'] = 1.0 + nrm((C,))
    p['xf_g_beta'] = nrm((C,))
    p['xf_g_mean'] = nrm((C,))
    p['xf_g_var'] = jnp.abs(nrm((C,))) + 1.0
    p['fi_w'] = nrm((Cout, 3 * C))
    p['fi_b'] = nrm((Cout,))
    p['fi_gamma'] = 1.0 + nrm((Cout,))
    p['fi_beta'] = nrm((Cout,))
    p['fi_mean'] = nrm((Cout,))
    p['fi_var'] = jnp.abs(nrm((Cout,))) + 1.0
    return p


# ------------------------- pure-JAX NCHW reference --------------------------
def ref_forward(zf, xf, zf_mask, p):
    def conv1x1(x, w, b=None):
        y = jnp.einsum('bchw,oc->bohw', x, w)
        if b is not None:
            y = y + b[None, :, None, None]
        return y

    def bn(x, gamma, beta, mean, var):
        return ((x - mean[None, :, None, None])
                / jnp.sqrt(var[None, :, None, None] + EPS_BN)
                * gamma[None, :, None, None] + beta[None, :, None, None])

    def normalize(x):
        n = jnp.sqrt(jnp.sum(x * x, axis=1, keepdims=True))
        return x / jnp.maximum(n, EPS_NORM)

    def calculate(z, x, zg):
        xn = normalize(x)
        zn = normalize(z)
        zf_fl = zn.reshape(zn.shape[0], zn.shape[1], -1)
        xf_fl = xn.reshape(xn.shape[0], xn.shape[1], -1)
        zg_fl = zg.reshape(zg.shape[0], zg.shape[1], -1)
        sim = jnp.einsum('bcn,bcm->bnm', xf_fl, zf_fl)
        ebd = jnp.einsum('bcm,bnm->bcn', zg_fl, sim)
        return ebd.reshape(x.shape)

    zf_fore = zf * zf_mask
    zf_back = zf * (1.0 - zf_mask)

    def group(z, pre):
        s = conv1x1(z, p[pre + '_support_w'])
        q = conv1x1(xf, p[pre + '_query_w'])
        g = jax.nn.relu(bn(conv1x1(z, p[pre + '_g_w'], p[pre + '_g_b']),
                           p[pre + '_g_gamma'], p[pre + '_g_beta'],
                           p[pre + '_g_mean'], p[pre + '_g_var']))
        return calculate(s, q, g)

    e_f = group(zf_fore, 'fore')
    e_b = group(zf_back, 'back')
    xg = jax.nn.relu(bn(conv1x1(xf, p['xf_g_w'], p['xf_g_b']),
                        p['xf_g_gamma'], p['xf_g_beta'],
                        p['xf_g_mean'], p['xf_g_var']))
    cat = jnp.concatenate([e_f, e_b, xg], axis=1)
    out = jax.nn.relu(bn(conv1x1(cat, p['fi_w'], p['fi_b']),
                         p['fi_gamma'], p['fi_beta'],
                         p['fi_mean'], p['fi_var']))
    return out


if __name__ == "__main__":
    key = jax.random.PRNGKey(0)
    k1, k2, k3, kp = jax.random.split(key, 4)

    B, C, Cout = 2, 32, 16
    Hz = Wz = 8      # template (zf) spatial
    Hx = Wx = 16     # search (xf) spatial

    zf = jax.random.normal(k1, (B, C, Hz, Wz), jnp.float32)
    xf = jax.random.normal(k2, (B, C, Hx, Wx), jnp.float32)
    zf_mask = (jax.random.uniform(k3, (B, 1, Hz, Wz)) > 0.5).astype(jnp.float32)

    params = init_params(kp, C, Cout)

    out = graph_attention_union(zf, xf, zf_mask, params)
    out = jax.block_until_ready(out)

    ref = ref_forward(zf, xf, zf_mask, params)
    assert out.shape == (B, Cout, Hx, Wx), out.shape
    max_err = float(jnp.max(jnp.abs(out - ref)))
    scale = float(jnp.max(jnp.abs(ref))) + 1e-6
    # bf16 MXU operands -> tolerance is relative to the output scale.
    assert max_err / scale < 3e-2, f"max abs error {max_err} (ref scale {scale})"
    print("KERNEL_OK")
</pallas_src>

<mosaic_0001>
module attributes {stable_mosaic.version = 11 : i64} {
  func.func @gat_kernel(%arg0: i32, %arg1: i32, %arg2: memref<1x32x128xbf16, #tpu.memory_space<vmem>>, %arg3: memref<1x1x128xf32, #tpu.memory_space<vmem>>, %arg4: memref<1x32x256xbf16, #tpu.memory_space<vmem>>, %arg5: memref<128x32xbf16, #tpu.memory_space<vmem>>, %arg6: memref<96x32xbf16, #tpu.memory_space<vmem>>, %arg7: memref<32x1xf32, #tpu.memory_space<vmem>>, %arg8: memref<32x1xf32, #tpu.memory_space<vmem>>, %arg9: memref<32x1xf32, #tpu.memory_space<vmem>>, %arg10: memref<16x32xbf16, #tpu.memory_space<vmem>>, %arg11: memref<16x32xbf16, #tpu.memory_space<vmem>>, %arg12: memref<16x32xbf16, #tpu.memory_space<vmem>>, %arg13: memref<16x1xf32, #tpu.memory_space<vmem>>, %arg14: memref<1x16x256xf32, #tpu.memory_space<vmem>>, %arg15: memref<16x288xbf16, #tpu.memory_space<vmem>>, %arg16: memref<288x256xbf16, #tpu.memory_space<vmem>>) attributes {dimension_semantics = [#tpu.dimension_semantics<parallel>, #tpu.dimension_semantics<parallel>], iteration_bounds = array<i64: 2, 1>, scalar_prefetch = 0 : i64, scratch_operands = 2 : i64, tpu.core_type = #tpu.core_type<tc>, window_params = [{transform_indices = @transform_0, window_bounds = array<i64: 1, 32, 128>}, {transform_indices = @transform_1, window_bounds = array<i64: 1, 1, 128>}, {transform_indices = @transform_2, window_bounds = array<i64: 1, 32, 256>}, {pipeline_mode = #tpu.pipeline_mode<synchronous>, transform_indices = @transform_3, window_bounds = array<i64: 128, 32>}, {pipeline_mode = #tpu.pipeline_mode<synchronous>, transform_indices = @transform_4, window_bounds = array<i64: 96, 32>}, {pipeline_mode = #tpu.pipeline_mode<synchronous>, transform_indices = @transform_5, window_bounds = array<i64: 32, 1>}, {pipeline_mode = #tpu.pipeline_mode<synchronous>, transform_indices = @transform_6, window_bounds = array<i64: 32, 1>}, {pipeline_mode = #tpu.pipeline_mode<synchronous>, transform_indices = @transform_7, window_bounds = array<i64: 32, 1>}, {pipeline_mode = #tpu.pipeline_mode<synchronous>, transform_indices = @transform_8, window_bounds = array<i64: 16, 32>}, {pipeline_mode = #tpu.pipeline_mode<synchronous>, transform_indices = @transform_9, window_bounds = array<i64: 16, 32>}, {pipeline_mode = #tpu.pipeline_mode<synchronous>, transform_indices = @transform_10, window_bounds = array<i64: 16, 32>}, {pipeline_mode = #tpu.pipeline_mode<synchronous>, transform_indices = @transform_11, window_bounds = array<i64: 16, 1>}, {transform_indices = @transform_12, window_bounds = array<i64: 1, 16, 256>}]} {
    %c0 = arith.constant 0 : index
    %c0_0 = arith.constant 0 : index
    %c0_1 = arith.constant 0 : index
    %0 = vector.load %arg2[%c0, %c0_0, %c0_1] : memref<1x32x128xbf16, #tpu.memory_space<vmem>>, vector<1x32x128xbf16>
    %1 = vector.shape_cast %0 : vector<1x32x128xbf16> to vector<32x128xbf16>
    %c0_2 = arith.constant 0 : index
    %c0_3 = arith.constant 0 : index
    %c0_4 = arith.constant 0 : index
    %2 = vector.load %arg3[%c0_2, %c0_3, %c0_4] : memref<1x1x128xf32, #tpu.memory_space<vmem>>, vector<1x1x128xf32>
    %3 = vector.shape_cast %2 : vector<1x1x128xf32> to vector<1x128xf32>
    %c0_5 = arith.constant 0 : index
    %c0_6 = arith.constant 0 : index
    %c0_7 = arith.constant 0 : index
    %4 = vector.load %arg4[%c0_5, %c0_6, %c0_7] : memref<1x32x256xbf16, #tpu.memory_space<vmem>>, vector<1x32x256xbf16>
    %5 = vector.shape_cast %4 : vector<1x32x256xbf16> to vector<32x256xbf16>
    %c0_8 = arith.constant 0 : index
    %c0_9 = arith.constant 0 : index
    %6 = vector.load %arg6[%c0_8, %c0_9] : memref<96x32xbf16, #tpu.memory_space<vmem>>, vector<96x32xbf16>
    %cst = arith.constant dense<0.000000e+00> : vector<96x256xf32>
    %7 = tpu.matmul %6, %5, %cst {dimension_numbers = #tpu.dot_dimension_numbers<[1], [0], [0], [1], [0, 0, 1, 1], [], []>} : vector<96x32xbf16>, vector<32x256xbf16>, vector<96x256xf32> -> vector<96x256xf32>
    %8 = vector.extract_strided_slice %7 {offsets = [0, 0], sizes = [32, 256], strides = [1, 1]} : vector<96x256xf32> to vector<32x256xf32>
    %9 = arith.mulf %8, %8 : vector<32x256xf32>
    %cst_10 = arith.constant dense<0.000000e+00> : vector<256xf32>
    %10 = vector.multi_reduction <add>, %9, %cst_10 [0] : vector<32x256xf32> to vector<256xf32>
    %11 = vector.shape_cast %10 : vector<256xf32> to vector<1x256xf32>
    %cst_11 = arith.constant 1.000000e-24 : f32
    %12 = vector.broadcast %cst_11 : f32 to vector<1x256xf32>
    %13 = arith.maximumf %11, %12 : vector<1x256xf32>
    %14 = math.rsqrt %13 : vector<1x256xf32>
    %15 = vector.broadcast %14 : vector<1x256xf32> to vector<32x256xf32>
    %16 = arith.mulf %8, %15 : vector<32x256xf32>
    %17 = arith.truncf %16 : vector<32x256xf32> to vector<32x256xbf16>
    %18 = vector.extract_strided_slice %7 {offsets = [32, 0], sizes = [32, 256], strides = [1, 1]} : vector<96x256xf32> to vector<32x256xf32>
    %19 = arith.mulf %18, %18 : vector<32x256xf32>
    %cst_12 = arith.constant dense<0.000000e+00> : vector<256xf32>
    %20 = vector.multi_reduction <add>, %19, %cst_12 [0] : vector<32x256xf32> to vector<256xf32>
    %21 = vector.shape_cast %20 : vector<256xf32> to vector<1x256xf32>
    %cst_13 = arith.constant 1.000000e-24 : f32
    %22 = vector.broadcast %cst_13 : f32 to vector<1x256xf32>
    %23 = arith.maximumf %21, %22 : vector<1x256xf32>
    %24 = math.rsqrt %23 : vector<1x256xf32>
    %25 = vector.broadcast %24 : vector<1x256xf32> to vector<32x256xf32>
    %26 = arith.mulf %18, %25 : vector<32x256xf32>
    %27 = arith.truncf %26 : vector<32x256xf32> to vector<32x256xbf16>
    %28 = vector.extract_strided_slice %7 {offsets = [64, 0], sizes = [32, 256], strides = [1, 1]} : vector<96x256xf32> to vector<32x256xf32>
    %c0_14 = arith.constant 0 : index
    %c0_15 = arith.constant 0 : index
    %29 = vector.load %arg9[%c0_14, %c0_15] : memref<32x1xf32, #tpu.memory_space<vmem>>, vector<32x1xf32>
    %30 = vector.broadcast %29 : vector<32x1xf32> to vector<32x256xf32>
    %31 = arith.addf %28, %30 : vector<32x256xf32>
    %cst_16 = arith.constant 0.000000e+00 : f32
    %32 = vector.broadcast %cst_16 : f32 to vector<32x256xf32>
    %33 = arith.maximumf %31, %32 : vector<32x256xf32>
    %c0_17 = arith.constant 0 : index
    %c0_18 = arith.constant 0 : index
    %34 = vector.load %arg5[%c0_17, %c0_18] : memref<128x32xbf16, #tpu.memory_space<vmem>>, vector<128x32xbf16>
    %cst_19 = arith.constant dense<0.000000e+00> : vector<128x128xf32>
    %35 = tpu.matmul %34, %1, %cst_19 {dimension_numbers = #tpu.dot_dimension_numbers<[1], [0], [0], [1], [0, 0, 1, 1], [], []>} : vector<128x32xbf16>, vector<32x128xbf16>, vector<128x128xf32> -> vector<128x128xf32>
    %36 = vector.extract_strided_slice %35 {offsets = [0, 0], sizes = [64, 128], strides = [1, 1]} : vector<128x128xf32> to vector<64x128xf32>
    %37 = vector.broadcast %3 : vector<1x128xf32> to vector<64x128xf32>
    %38 = arith.mulf %36, %37 : vector<64x128xf32>
    %39 = vector.extract_strided_slice %35 {offsets = [64, 0], sizes = [64, 128], strides = [1, 1]} : vector<128x128xf32> to vector<64x128xf32>
    %cst_20 = arith.constant 1.000000e+00 : f32
    %40 = vector.broadcast %cst_20 : f32 to vector<1x128xf32>
    %41 = arith.subf %40, %3 : vector<1x128xf32>
    %42 = vector.broadcast %41 : vector<1x128xf32> to vector<64x128xf32>
    %43 = arith.mulf %39, %42 : vector<64x128xf32>
    %44 = vector.extract_strided_slice %38 {offsets = [0, 0], sizes = [32, 128], strides = [1, 1]} : vector<64x128xf32> to vector<32x128xf32>
    %45 = arith.mulf %44, %44 : vector<32x128xf32>
    %cst_21 = arith.constant dense<0.000000e+00> : vector<128xf32>
    %46 = vector.multi_reduction <add>, %45, %cst_21 [0] : vector<32x128xf32> to vector<128xf32>
    %47 = vector.shape_cast %46 : vector<128xf32> to vector<1x128xf32>
    %cst_22 = arith.constant 1.000000e-24 : f32
    %48 = vector.broadcast %cst_22 : f32 to vector<1x128xf32>
    %49 = arith.maximumf %47, %48 : vector<1x128xf32>
    %50 = math.rsqrt %49 : vector<1x128xf32>
    %51 = vector.broadcast %50 : vector<1x128xf32> to vector<32x128xf32>
    %52 = arith.mulf %44, %51 : vector<32x128xf32>
    %53 = arith.truncf %52 : vector<32x128xf32> to vector<32x128xbf16>
    %54 = vector.extract_strided_slice %38 {offsets = [32, 0], sizes = [32, 128], strides = [1, 1]} : vector<64x128xf32> to vector<32x128xf32>
    %c0_23 = arith.constant 0 : index
    %c0_24 = arith.constant 0 : index
    %55 = vector.load %arg7[%c0_23, %c0_24] : memref<32x1xf32, #tpu.memory_space<vmem>>, vector<32x1xf32>
    %56 = vector.broadcast %55 : vector<32x1xf32> to vector<32x128xf32>
    %57 = arith.addf %54, %56 : vector<32x128xf32>
    %cst_25 = arith.constant 0.000000e+00 : f32
    %58 = vector.broadcast %cst_25 : f32 to vector<32x128xf32>
    %59 = arith.maximumf %57, %58 : vector<32x128xf32>
    %60 = arith.truncf %59 : vector<32x128xf32> to vector<32x128xbf16>
    %cst_26 = arith.constant dense<0.000000e+00> : vector<128x256xf32>
    %61 = tpu.matmul %53, %17, %cst_26 {dimension_numbers = #tpu.dot_dimension_numbers<[0], [0], [1], [1], [0, 1, 1, 1], [], []>} : vector<32x128xbf16>, vector<32x256xbf16>, vector<128x256xf32> -> vector<128x256xf32>
    %c0_27 = arith.constant 0 : index
    %c0_28 = arith.constant 0 : index
    %62 = vector.load %arg10[%c0_27, %c0_28] : memref<16x32xbf16, #tpu.memory_space<vmem>>, vector<16x32xbf16>
    %cst_29 = arith.constant dense<0.000000e+00> : vector<16x128xf32>
    %63 = tpu.matmul %62, %60, %cst_29 {dimension_numbers = #tpu.dot_dimension_numbers<[1], [0], [0], [1], [0, 0, 1, 1], [], []>} : vector<16x32xbf16>, vector<32x128xbf16>, vector<16x128xf32> -> vector<16x128xf32>
    %64 = arith.truncf %63 : vector<16x128xf32> to vector<16x128xbf16>
    %65 = arith.truncf %61 : vector<128x256xf32> to vector<128x256xbf16>
    %66 = vector.extract_strided_slice %43 {offsets = [0, 0], sizes = [32, 128], strides = [1, 1]} : vector<64x128xf32> to vector<32x128xf32>
    %67 = arith.mulf %66, %66 : vector<32x128xf32>
    %cst_30 = arith.constant dense<0.000000e+00> : vector<128xf32>
    %68 = vector.multi_reduction <add>, %67, %cst_30 [0] : vector<32x128xf32> to vector<128xf32>
    %69 = vector.shape_cast %68 : vector<128xf32> to vector<1x128xf32>
    %cst_31 = arith.constant 1.000000e-24 : f32
    %70 = vector.broadcast %cst_31 : f32 to vector<1x128xf32>
    %71 = arith.maximumf %69, %70 : vector<1x128xf32>
    %72 = math.rsqrt %71 : vector<1x128xf32>
    %73 = vector.broadcast %72 : vector<1x128xf32> to vector<32x128xf32>
    %74 = arith.mulf %66, %73 : vector<32x128xf32>
    %75 = arith.truncf %74 : vector<32x128xf32> to vector<32x128xbf16>
    %76 = vector.extract_strided_slice %43 {offsets = [32, 0], sizes = [32, 128], strides = [1, 1]} : vector<64x128xf32> to vector<32x128xf32>
    %c0_32 = arith.constant 0 : index
    %c0_33 = arith.constant 0 : index
    %77 = vector.load %arg8[%c0_32, %c0_33] : memref<32x1xf32, #tpu.memory_space<vmem>>, vector<32x1xf32>
    %78 = vector.broadcast %77 : vector<32x1xf32> to vector<32x128xf32>
    %79 = arith.addf %76, %78 : vector<32x128xf32>
    %cst_34 = arith.constant 0.000000e+00 : f32
    %80 = vector.broadcast %cst_34 : f32 to vector<32x128xf32>
    %81 = arith.maximumf %79, %80 : vector<32x128xf32>
    %82 = arith.truncf %81 : vector<32x128xf32> to vector<32x128xbf16>
    %cst_35 = arith.constant dense<0.000000e+00> : vector<128x256xf32>
    %83 = tpu.matmul %75, %27, %cst_35 {dimension_numbers = #tpu.dot_dimension_numbers<[0], [0], [1], [1], [0, 1, 1, 1], [], []>} : vector<32x128xbf16>, vector<32x256xbf16>, vector<128x256xf32> -> vector<128x256xf32>
    %c0_36 = arith.constant 0 : index
    %c0_37 = arith.constant 0 : index
    %84 = vector.load %arg11[%c0_36, %c0_37] : memref<16x32xbf16, #tpu.memory_space<vmem>>, vector<16x32xbf16>
    %cst_38 = arith.constant dense<0.000000e+00> : vector<16x128xf32>
    %85 = tpu.matmul %84, %82, %cst_38 {dimension_numbers = #tpu.dot_dimension_numbers<[1], [0], [0], [1], [0, 0, 1, 1], [], []>} : vector<16x32xbf16>, vector<32x128xbf16>, vector<16x128xf32> -> vector<16x128xf32>
    %86 = arith.truncf %85 : vector<16x128xf32> to vector<16x128xbf16>
    %87 = arith.truncf %83 : vector<128x256xf32> to vector<128x256xbf16>
    %c0_39 = arith.constant 0 : index
    %c0_40 = arith.constant 0 : index
    %88 = vector.load %arg15[%c0_39, %c0_40] : memref<16x288xbf16, #tpu.memory_space<vmem>>, vector<16x128xbf16>
    tpu.vector_store %arg15[%c0_39, %c0_40], %64 {strides = array<i32>} : memref<16x288xbf16, #tpu.memory_space<vmem>>, vector<16x128xbf16>,
    %c0_41 = arith.constant 0 : index
    %c128 = arith.constant 128 : index
    %89 = vector.load %arg15[%c0_41, %c128] : memref<16x288xbf16, #tpu.memory_space<vmem>>, vector<16x128xbf16>
    tpu.vector_store %arg15[%c0_41, %c128], %86 {strides = array<i32>} : memref<16x288xbf16, #tpu.memory_space<vmem>>, vector<16x128xbf16>,
    %c0_42 = arith.constant 0 : index
    %c0_43 = arith.constant 0 : index
    %90 = vector.load %arg12[%c0_42, %c0_43] : memref<16x32xbf16, #tpu.memory_space<vmem>>, vector<16x32xbf16>
    %c0_44 = arith.constant 0 : index
    %c256 = arith.constant 256 : index
    %91 = vector.load %arg15[%c0_44, %c256] : memref<16x288xbf16, #tpu.memory_space<vmem>>, vector<16x32xbf16>
    tpu.vector_store %arg15[%c0_44, %c256], %90 {strides = array<i32>} : memref<16x288xbf16, #tpu.memory_space<vmem>>, vector<16x32xbf16>,
    %c0_45 = arith.constant 0 : index
    %c0_46 = arith.constant 0 : index
    %92 = vector.load %arg16[%c0_45, %c0_46] : memref<288x256xbf16, #tpu.memory_space<vmem>>, vector<128x256xbf16>
    tpu.vector_store %arg16[%c0_45, %c0_46], %65 {strides = array<i32>} : memref<288x256xbf16, #tpu.memory_space<vmem>>, vector<128x256xbf16>,
    %c128_47 = arith.constant 128 : index
    %c0_48 = arith.constant 0 : index
    %93 = vector.load %arg16[%c128_47, %c0_48] : memref<288x256xbf16, #tpu.memory_space<vmem>>, vector<128x256xbf16>
    tpu.vector_store %arg16[%c128_47, %c0_48], %87 {strides = array<i32>} : memref<288x256xbf16, #tpu.memory_space<vmem>>, vector<128x256xbf16>,
    %94 = arith.truncf %33 : vector<32x256xf32> to vector<32x256xbf16>
    %c256_49 = arith.constant 256 : index
    %c0_50 = arith.constant 0 : index
    %95 = vector.load %arg16[%c256_49, %c0_50] : memref<288x256xbf16, #tpu.memory_space<vmem>>, vector<32x256xbf16>
    tpu.vector_store %arg16[%c256_49, %c0_50], %94 {strides = array<i32>} : memref<288x256xbf16, #tpu.memory_space<vmem>>, vector<32x256xbf16>,
    %c0_51 = arith.constant 0 : index
    %c0_52 = arith.constant 0 : index
    %96 = vector.load %arg15[%c0_51, %c0_52] : memref<16x288xbf16, #tpu.memory_space<vmem>>, vector<16x288xbf16>
    %c0_53 = arith.constant 0 : index
    %c0_54 = arith.constant 0 : index
    %97 = vector.load %arg16[%c0_53, %c0_54] : memref<288x256xbf16, #tpu.memory_space<vmem>>, vector<288x256xbf16>
    %cst_55 = arith.constant dense<0.000000e+00> : vector<16x256xf32>
    %98 = tpu.matmul %96, %97, %cst_55 {dimension_numbers = #tpu.dot_dimension_numbers<[1], [0], [0], [1], [0, 0, 1, 1], [], []>} : vector<16x288xbf16>, vector<288x256xbf16>, vector<16x256xf32> -> vector<16x256xf32>
    %c0_56 = arith.constant 0 : index
    %c0_57 = arith.constant 0 : index
    %99 = vector.load %arg13[%c0_56, %c0_57] : memref<16x1xf32, #tpu.memory_space<vmem>>, vector<16x1xf32>
    %100 = vector.broadcast %99 : vector<16x1xf32> to vector<16x256xf32>
    %101 = arith.addf %98, %100 : vector<16x256xf32>
    %cst_58 = arith.constant 0.000000e+00 : f32
    %102 = vector.broadcast %cst_58 : f32 to vector<16x256xf32>
    %103 = arith.maximumf %101, %102 : vector<16x256xf32>
    %c0_59 = arith.constant 0 : index
    %c0_60 = arith.constant 0 : index
    %c0_61 = arith.constant 0 : index
    %104 = vector.load %arg14[%c0_59, %c0_60, %c0_61] : memref<1x16x256xf32, #tpu.memory_space<vmem>>, vector<1x16x256xf32>
    %105 = vector.shape_cast %104 : vector<1x16x256xf32> to vector<16x256xf32>
    %106 = vector.shape_cast %103 : vector<16x256xf32> to vector<1x16x256xf32>
    tpu.vector_store %arg14[%c0_59, %c0_60, %c0_61], %106 {strides = array<i32>} : memref<1x16x256xf32, #tpu.memory_space<vmem>>, vector<1x16x256xf32>,
    return
  }
  func.func @transform_0(%arg0: i32, %arg1: i32) -> (i32, i32, i32) {
    %c0_i32 = arith.constant 0 : i32
    %c0_i32_0 = arith.constant 0 : i32
    %c0_i32_1 = arith.constant 0 : i32
    return %arg0, %c0_i32, %c0_i32_0 : i32, i32, i32
  }
  func.func @transform_1(%arg0: i32, %arg1: i32) -> (i32, i32, i32) {
    %c0_i32 = arith.constant 0 : i32
    %c0_i32_0 = arith.constant 0 : i32
    %c0_i32_1 = arith.constant 0 : i32
    return %arg0, %c0_i32, %c0_i32_0 : i32, i32, i32
  }
  func.func @transform_2(%arg0: i32, %arg1: i32) -> (i32, i32, i32) {
    %c0_i32 = arith.constant 0 : i32
    %c0_i32_0 = arith.constant 0 : i32
    return %arg0, %c0_i32, %arg1 : i32, i32, i32
  }
  func.func @transform_3(%arg0: i32, %arg1: i32) -> (i32, i32) {
    %c0_i32 = arith.constant 0 : i32
    %c0_i32_0 = arith.constant 0 : i32
    %c0_i32_1 = arith.constant 0 : i32
    return %c0_i32, %c0_i32_0 : i32, i32
  }
  func.func @transform_4(%arg0: i32, %arg1: i32) -> (i32, i32) {
    %c0_i32 = arith.constant 0 : i32
    %c0_i32_0 = arith.constant 0 : i32
    %c0_i32_1 = arith.constant 0 : i32
    return %c0_i32, %c0_i32_0 : i32, i32
  }
  func.func @transform_5(%arg0: i32, %arg1: i32) -> (i32, i32) {
    %c0_i32 = arith.constant 0 : i32
    %c0_i32_0 = arith.constant 0 : i32
    %c0_i32_1 = arith.constant 0 : i32
    return %c0_i32, %c0_i32_0 : i32, i32
  }
  func.func @transform_6(%arg0: i32, %arg1: i32) -> (i32, i32) {
    %c0_i32 = arith.constant 0 : i32
    %c0_i32_0 = arith.constant 0 : i32
    %c0_i32_1 = arith.constant 0 : i32
    return %c0_i32, %c0_i32_0 : i32, i32
  }
  func.func @transform_7(%arg0: i32, %arg1: i32) -> (i32, i32) {
    %c0_i32 = arith.constant 0 : i32
    %c0_i32_0 = arith.constant 0 : i32
    %c0_i32_1 = arith.constant 0 : i32
    return %c0_i32, %c0_i32_0 : i32, i32
  }
  func.func @transform_8(%arg0: i32, %arg1: i32) -> (i32, i32) {
    %c0_i32 = arith.constant 0 : i32
    %c0_i32_0 = arith.constant 0 : i32
    %c0_i32_1 = arith.constant 0 : i32
    return %c0_i32, %c0_i32_0 : i32, i32
  }
  func.func @transform_9(%arg0: i32, %arg1: i32) -> (i32, i32) {
    %c0_i32 = arith.constant 0 : i32
    %c0_i32_0 = arith.constant 0 : i32
    %c0_i32_1 = arith.constant 0 : i32
    return %c0_i32, %c0_i32_0 : i32, i32
  }
  func.func @transform_10(%arg0: i32, %arg1: i32) -> (i32, i32) {
    %c0_i32 = arith.constant 0 : i32
    %c0_i32_0 = arith.constant 0 : i32
    %c0_i32_1 = arith.constant 0 : i32
    return %c0_i32, %c0_i32_0 : i32, i32
  }
  func.func @transform_11(%arg0: i32, %arg1: i32) -> (i32, i32) {
    %c0_i32 = arith.constant 0 : i32
    %c0_i32_0 = arith.constant 0 : i32
    %c0_i32_1 = arith.constant 0 : i32
    return %c0_i32, %c0_i32_0 : i32, i32
  }
  func.func @transform_12(%arg0: i32, %arg1: i32) -> (i32, i32, i32) {
    %c0_i32 = arith.constant 0 : i32
    %c0_i32_0 = arith.constant 0 : i32
    return %arg0, %c0_i32, %arg1 : i32, i32, i32
  }
}

</mosaic_0001>

<llo_original>
// kernel: tpu_custom_call.1
$region0: #{tpu_custom_call.1}
  #allocation0 [shape = 'u32[]', space=smem, size = 0x4, offset = 0x4, fixed_abs, tag = 'smem constant byte address 0x4 - core index']
  #allocation1 [shape = 'u32[144,128]{1,0:T(1,128)}', space=vmem, size = 0x12000, scoped, tag = 'internal scratch']
  #allocation2 [shape = 'bf16[16,288]{1,0:T(16,128)(2,1)}', space=vmem, size = 0x3000, scoped, tag = 'scratch operand']
  #allocation3 [shape = 'bf16[288,256]{1,0:T(16,128)(2,1)}', space=vmem, size = 0x24000, scoped, tag = 'scratch operand']
  %s0 = inlined_call_operand.vmem [shape: bf16[2,32,128], index: 0, kind: input, shape index: {}]
  %s1 = inlined_call_operand.vmem [shape: f32[2,1,128], index: 1, kind: input, shape index: {}]
  %s2 = inlined_call_operand.vmem [shape: bf16[2,32,256], index: 2, kind: input, shape index: {}]
  %s3 = inlined_call_operand.vmem [shape: bf16[128,32], index: 3, kind: input, shape index: {}]
  %s4 = inlined_call_operand.vmem [shape: bf16[96,32], index: 4, kind: input, shape index: {}]
  %s5 = inlined_call_operand.vmem [shape: f32[32,1], index: 5, kind: input, shape index: {}]
  %s6 = inlined_call_operand.vmem [shape: f32[32,1], index: 6, kind: input, shape index: {}]
  %s7 = inlined_call_operand.vmem [shape: f32[32,1], index: 7, kind: input, shape index: {}]
  %s8 = inlined_call_operand.vmem [shape: bf16[16,32], index: 8, kind: input, shape index: {}]
  %s9 = inlined_call_operand.vmem [shape: bf16[16,32], index: 9, kind: input, shape index: {}]
  %s10 = inlined_call_operand.vmem [shape: bf16[16,32], index: 10, kind: input, shape index: {}]
  %s11 = inlined_call_operand.vmem [shape: f32[16,1], index: 11, kind: input, shape index: {}]
  %s12 = inlined_call_operand.hbm [shape: f32[2,16,256], index: 12, kind: output, shape index: {}]
  %s13 = sld [smem:[#allocation0]]
  $region81: #{tpu_custom_call.1} parent=0
    _
  %s15 = ssub.s32 1, %s13
  %s16 = scalar_select 0, %s15, %s13
  $region1: #{tpu_custom_call.1} parent=0
    #allocation4 [shape = 'u8[32768]{0}', space=vmem, size = 0x8000, scoped, tag = 'output window, operand 0']
    #allocation5 [shape = 's32[2]{0}', space=sflag, size = 0x8, scoped, tag = 'scoped memory for tpu_custom_call.1']
    %17 = vsyncpa [#allocation5], 0
    %s18 = scalar_lea.sflag [#allocation5], 1
    %19 = vsyncpa %s18, 0
    loop: start=0, step=1, limit=4
    $region2: #{tpu_custom_call.1} parent=1 // loop_pre_header
      _
    $region3: #{tpu_custom_call.1} parent=1 // loop_header
      %s21 = sphi 0, %s25
      %p22 = scmp.ge.s32.totalorder %s21, 4
      %s28 = sphi 0, %s40
      %s29 = sphi 0, %s36
      %s30 = sphi 0, %s28
      %s31 = sphi 0, %s29
      %s32 = sphi 0, %s30
      %s33 = sphi 0, %s31
      %s43 = sphi 0, %s45
      %s46 = sphi 0, %s43
      %s47 = sphi 0, %s46
      %s63 = sphi 0, %s47
      %s69 = sphi 0, %s71
      %s72 = sphi 0, %s69
      %s73 = sphi 0, %s72
      %s89 = sphi 0, %s73
      %s97 = sphi 0, %s99
      %s100 = sphi 0, %s97
      %s101 = sphi 0, %s100
      %s117 = sphi 0, %s101
      %s121 = sphi 0, %s121
      %s123 = sphi 0, %s121
      %s124 = sphi 0, %s123
      %s138 = sphi 0, %s124
      %s142 = sphi 0, %s142
      %s144 = sphi 0, %s142
      %s145 = sphi 0, %s144
      %s159 = sphi 0, %s145
      %s163 = sphi 0, %s163
      %s165 = sphi 0, %s163
      %s166 = sphi 0, %s165
      %s180 = sphi 0, %s166
      %s184 = sphi 0, %s184
      %s186 = sphi 0, %s184
      %s187 = sphi 0, %s186
      %s201 = sphi 0, %s187
      %s205 = sphi 0, %s205
      %s207 = sphi 0, %s205
      %s208 = sphi 0, %s207
      %s222 = sphi 0, %s208
      %s226 = sphi 0, %s226
      %s228 = sphi 0, %s226
      %s229 = sphi 0, %s228
      %s243 = sphi 0, %s229
      %s247 = sphi 0, %s247
      %s249 = sphi 0, %s247
      %s250 = sphi 0, %s249
      %s264 = sphi 0, %s250
      %s268 = sphi 0, %s268
      %s270 = sphi 0, %s268
      %s271 = sphi 0, %s270
      %s285 = sphi 0, %s271
      %s289 = sphi 0, %s289
      %s291 = sphi 0, %s289
      %s292 = sphi 0, %s291
      %s306 = sphi 0, %s292
      %s314 = sphi 0, %s316
      %s317 = sphi 0, %s314
      %s318 = sphi 0, %s317
      %s334 = sphi 0, %s318
    $region4: #{tpu_custom_call.1} parent=1 // loop_header_branch
      %24 = sbr.rel (%p22) target = $region8
    $region5: #{tpu_custom_call.1} parent=1 // loop_body
      %s26 = ssub.s32 %s21, 1
      %s27 = ssub.s32 %s21, 2
      %s34 = sadd.s32 1, %s29
      %p35 = scmp.ge.s32.totalorder %s34, 1
      %s36 = scalar_select %p35, 0, %s34
      %s37 = sadd.s32 1, %s28
      %s38 = scalar_select %p35, %s37, %s28
      %p39 = scmp.ge.s32.totalorder %s38, 2
      %s40 = scalar_select %p39, 0, %s38
      %s41 = ssub.s32 %s28, %s40
      %p42 = scmp.eq.s32.totalorder %s41, 0
      %s44 = sadd.s32 %s43, 1
      %s45 = scalar_select %p42, %s43, %s44
      %p48 = pneg %p42
      %p49 = scmp.eq.s32.totalorder %s21, 1
      %p50 = por %p48, %p49
      %p51 = scmp.ne.s32.totalorder %s43, %s46
      %p52 = scmp.eq.s32.totalorder %s21, 0
      %p53 = por %p51, %p52
      %p54 = scmp.ne.s32.totalorder %s43, %s46
      %p55 = scmp.eq.s32.totalorder %s26, 1
      %p56 = por %p54, %p55
      %p57 = scmp.ne.s32.totalorder %s46, %s47
      %p58 = scmp.eq.s32.totalorder %s26, 0
      %p59 = por %p57, %p58
      %p60 = scmp.ne.s32.totalorder %s46, %s47
      %p61 = scmp.eq.s32.totalorder %s27, 1
      %p62 = por %p60, %p61
      %p64 = scmp.ne.s32.totalorder %s47, %s63
      %p65 = scmp.eq.s32.totalorder %s27, 0
      %p66 = por %p64, %p65
      %s67 = ssub.s32 %s28, %s40
      %p68 = scmp.eq.s32.totalorder %s67, 0
      %s70 = sadd.s32 %s69, 1
      %s71 = scalar_select %p68, %s69, %s70
      %p74 = pneg %p68
      %p75 = scmp.eq.s32.totalorder %s21, 1
      %p76 = por %p74, %p75
      %p77 = scmp.ne.s32.totalorder %s69, %s72
      %p78 = scmp.eq.s32.totalorder %s21, 0
      %p79 = por %p77, %p78
      %p80 = scmp.ne.s32.totalorder %s69, %s72
      %p81 = scmp.eq.s32.totalorder %s26, 1
      %p82 = por %p80, %p81
      %p83 = scmp.ne.s32.totalorder %s72, %s73
      %p84 = scmp.eq.s32.totalorder %s26, 0
      %p85 = por %p83, %p84
      %p86 = scmp.ne.s32.totalorder %s72, %s73
      %p87 = scmp.eq.s32.totalorder %s27, 1
      %p88 = por %p86, %p87
      %p90 = scmp.ne.s32.totalorder %s73, %s89
      %p91 = scmp.eq.s32.totalorder %s27, 0
      %p92 = por %p90, %p91
      %s93 = ssub.s32 %s28, %s40
      %s94 = ssub.s32 %s29, %s36
      %s95 = sor.u32 %s93, %s94
      %p96 = scmp.eq.s32.totalorder %s95, 0
      %s98 = sadd.s32 %s97, 1
      %s99 = scalar_select %p96, %s97, %s98
      %p102 = pneg %p96
      %p103 = scmp.eq.s32.totalorder %s21, 1
      %p104 = por %p102, %p103
      %p105 = scmp.ne.s32.totalorder %s97, %s100
      %p106 = scmp.eq.s32.totalorder %s21, 0
      %p107 = por %p105, %p106
      %p108 = scmp.ne.s32.totalorder %s97, %s100
      %p109 = scmp.eq.s32.totalorder %s26, 1
      %p110 = por %p108, %p109
      %p111 = scmp.ne.s32.totalorder %s100, %s101
      %p112 = scmp.eq.s32.totalorder %s26, 0
      %p113 = por %p111, %p112
      %p114 = scmp.ne.s32.totalorder %s100, %s101
      %p115 = scmp.eq.s32.totalorder %s27, 1
      %p116 = por %p114, %p115
      %p118 = scmp.ne.s32.totalorder %s101, %s117
      %p119 = scmp.eq.s32.totalorder %s27, 0
      %p120 = por %p118, %p119
      %s122 = sadd.s32 %s121, 1
      %p125 = scmp.eq.s32.totalorder %s21, 1
      %p126 = scmp.ne.s32.totalorder %s121, %s123
      %p127 = scmp.eq.s32.totalorder %s21, 0
      %p128 = por %p126, %p127
      %p129 = scmp.ne.s32.totalorder %s121, %s123
      %p130 = scmp.eq.s32.totalorder %s26, 1
      %p131 = por %p129, %p130
      %p132 = scmp.ne.s32.totalorder %s123, %s124
      %p133 = scmp.eq.s32.totalorder %s26, 0
      %p134 = por %p132, %p133
      %p135 = scmp.ne.s32.totalorder %s123, %s124
      %p136 = scmp.eq.s32.totalorder %s27, 1
      %p137 = por %p135, %p136
      %p139 = scmp.ne.s32.totalorder %s124, %s138
      %p140 = scmp.eq.s32.totalorder %s27, 0
      %p141 = por %p139, %p140
      %s143 = sadd.s32 %s142, 1
      %p146 = scmp.eq.s32.totalorder %s21, 1
      %p147 = scmp.ne.s32.totalorder %s142, %s144
      %p148 = scmp.eq.s32.totalorder %s21, 0
      %p149 = por %p147, %p148
      %p150 = scmp.ne.s32.totalorder %s142, %s144
      %p151 = scmp.eq.s32.totalorder %s26, 1
      %p152 = por %p150, %p151
      %p153 = scmp.ne.s32.totalorder %s144, %s145
      %p154 = scmp.eq.s32.totalorder %s26, 0
      %p155 = por %p153, %p154
      %p156 = scmp.ne.s32.totalorder %s144, %s145
      %p157 = scmp.eq.s32.totalorder %s27, 1
      %p158 = por %p156, %p157
      %p160 = scmp.ne.s32.totalorder %s145, %s159
      %p161 = scmp.eq.s32.totalorder %s27, 0
      %p162 = por %p160, %p161
      %s164 = sadd.s32 %s163, 1
      %p167 = scmp.eq.s32.totalorder %s21, 1
      %p168 = scmp.ne.s32.totalorder %s163, %s165
      %p169 = scmp.eq.s32.totalorder %s21, 0
      %p170 = por %p168, %p169
      %p171 = scmp.ne.s32.totalorder %s163, %s165
      %p172 = scmp.eq.s32.totalorder %s26, 1
      %p173 = por %p171, %p172
      %p174 = scmp.ne.s32.totalorder %s165, %s166
      %p175 = scmp.eq.s32.totalorder %s26, 0
      %p176 = por %p174, %p175
      %p177 = scmp.ne.s32.totalorder %s165, %s166
      %p178 = scmp.eq.s32.totalorder %s27, 1
      %p179 = por %p177, %p178
      %p181 = scmp.ne.s32.totalorder %s166, %s180
      %p182 = scmp.eq.s32.totalorder %s27, 0
      %p183 = por %p181, %p182
      %s185 = sadd.s32 %s184, 1
      %p188 = scmp.eq.s32.totalorder %s21, 1
      %p189 = scmp.ne.s32.totalorder %s184, %s186
      %p190 = scmp.eq.s32.totalorder %s21, 0
      %p191 = por %p189, %p190
      %p192 = scmp.ne.s32.totalorder %s184, %s186
      %p193 = scmp.eq.s32.totalorder %s26, 1
      %p194 = por %p192, %p193
      %p195 = scmp.ne.s32.totalorder %s186, %s187
      %p196 = scmp.eq.s32.totalorder %s26, 0
      %p197 = por %p195, %p196
      %p198 = scmp.ne.s32.totalorder %s186, %s187
      %p199 = scmp.eq.s32.totalorder %s27, 1
      %p200 = por %p198, %p199
      %p202 = scmp.ne.s32.totalorder %s187, %s201
      %p203 = scmp.eq.s32.totalorder %s27, 0
      %p204 = por %p202, %p203
      %s206 = sadd.s32 %s205, 1
      %p209 = scmp.eq.s32.totalorder %s21, 1
      %p210 = scmp.ne.s32.totalorder %s205, %s207
      %p211 = scmp.eq.s32.totalorder %s21, 0
      %p212 = por %p210, %p211
      %p213 = scmp.ne.s32.totalorder %s205, %s207
      %p214 = scmp.eq.s32.totalorder %s26, 1
      %p215 = por %p213, %p214
      %p216 = scmp.ne.s32.totalorder %s207, %s208
      %p217 = scmp.eq.s32.totalorder %s26, 0
      %p218 = por %p216, %p217
      %p219 = scmp.ne.s32.totalorder %s207, %s208
      %p220 = scmp.eq.s32.totalorder %s27, 1
      %p221 = por %p219, %p220
      %p223 = scmp.ne.s32.totalorder %s208, %s222
      %p224 = scmp.eq.s32.totalorder %s27, 0
      %p225 = por %p223, %p224
      %s227 = sadd.s32 %s226, 1
      %p230 = scmp.eq.s32.totalorder %s21, 1
      %p231 = scmp.ne.s32.totalorder %s226, %s228
      %p232 = scmp.eq.s32.totalorder %s21, 0
      %p233 = por %p231, %p232
      %p234 = scmp.ne.s32.totalorder %s226, %s228
      %p235 = scmp.eq.s32.totalorder %s26, 1
      %p236 = por %p234, %p235
      %p237 = scmp.ne.s32.totalorder %s228, %s229
      %p238 = scmp.eq.s32.totalorder %s26, 0
      %p239 = por %p237, %p238
      %p240 = scmp.ne.s32.totalorder %s228, %s229
      %p241 = scmp.eq.s32.totalorder %s27, 1
      %p242 = por %p240, %p241
      %p244 = scmp.ne.s32.totalorder %s229, %s243
      %p245 = scmp.eq.s32.totalorder %s27, 0
      %p246 = por %p244, %p245
      %s248 = sadd.s32 %s247, 1
      %p251 = scmp.eq.s32.totalorder %s21, 1
      %p252 = scmp.ne.s32.totalorder %s247, %s249
      %p253 = scmp.eq.s32.totalorder %s21, 0
      %p254 = por %p252, %p253
      %p255 = scmp.ne.s32.totalorder %s247, %s249
      %p256 = scmp.eq.s32.totalorder %s26, 1
      %p257 = por %p255, %p256
      %p258 = scmp.ne.s32.totalorder %s249, %s250
      %p259 = scmp.eq.s32.totalorder %s26, 0
      %p260 = por %p258, %p259
      %p261 = scmp.ne.s32.totalorder %s249, %s250
      %p262 = scmp.eq.s32.totalorder %s27, 1
      %p263 = por %p261, %p262
      %p265 = scmp.ne.s32.totalorder %s250, %s264
      %p266 = scmp.eq.s32.totalorder %s27, 0
      %p267 = por %p265, %p266
      %s269 = sadd.s32 %s268, 1
      %p272 = scmp.eq.s32.totalorder %s21, 1
      %p273 = scmp.ne.s32.totalorder %s268, %s270
      %p274 = scmp.eq.s32.totalorder %s21, 0
      %p275 = por %p273, %p274
      %p276 = scmp.ne.s32.totalorder %s268, %s270
      %p277 = scmp.eq.s32.totalorder %s26, 1
      %p278 = por %p276, %p277
      %p279 = scmp.ne.s32.totalorder %s270, %s271
      %p280 = scmp.eq.s32.totalorder %s26, 0
      %p281 = por %p279, %p280
      %p282 = scmp.ne.s32.totalorder %s270, %s271
      %p283 = scmp.eq.s32.totalorder %s27, 1
      %p284 = por %p282, %p283
      %p286 = scmp.ne.s32.totalorder %s271, %s285
      %p287 = scmp.eq.s32.totalorder %s27, 0
      %p288 = por %p286, %p287
      %s290 = sadd.s32 %s289, 1
      %p293 = scmp.eq.s32.totalorder %s21, 1
      %p294 = scmp.ne.s32.totalorder %s289, %s291
      %p295 = scmp.eq.s32.totalorder %s21, 0
      %p296 = por %p294, %p295
      %p297 = scmp.ne.s32.totalorder %s289, %s291
      %p298 = scmp.eq.s32.totalorder %s26, 1
      %p299 = por %p297, %p298
      %p300 = scmp.ne.s32.totalorder %s291, %s292
      %p301 = scmp.eq.s32.totalorder %s26, 0
      %p302 = por %p300, %p301
      %p303 = scmp.ne.s32.totalorder %s291, %s292
      %p304 = scmp.eq.s32.totalorder %s27, 1
      %p305 = por %p303, %p304
      %p307 = scmp.ne.s32.totalorder %s292, %s306
      %p308 = scmp.eq.s32.totalorder %s27, 0
      %p309 = por %p307, %p308
      %s310 = ssub.s32 %s28, %s40
      %s311 = ssub.s32 %s29, %s36
      %s312 = sor.u32 %s310, %s311
      %p313 = scmp.eq.s32.totalorder %s312, 0
      %s315 = sadd.s32 %s314, 1
      %s316 = scalar_select %p313, %s314, %s315
      %p319 = pneg %p313
      %p320 = scmp.eq.s32.totalorder %s21, 1
      %p321 = por %p319, %p320
      %p322 = scmp.ne.s32.totalorder %s314, %s317
      %p323 = scmp.eq.s32.totalorder %s21, 0
      %p324 = por %p322, %p323
      %p325 = scmp.ne.s32.totalorder %s314, %s317
      %p326 = scmp.eq.s32.totalorder %s26, 1
      %p327 = por %p325, %p326
      %p328 = scmp.ne.s32.totalorder %s317, %s318
      %p329 = scmp.eq.s32.totalorder %s26, 0
      %p330 = por %p328, %p329
      %p331 = scmp.ne.s32.totalorder %s317, %s318
      %p332 = scmp.eq.s32.totalorder %s27, 1
      %p333 = por %p331, %p332
      %p335 = scmp.ne.s32.totalorder %s318, %s334
      %p336 = scmp.eq.s32.totalorder %s27, 0
      %p337 = por %p335, %p336
      %p338 = scmp.le.s32.totalorder 1, %s21
      %p339 = scmp.lt.s32.totalorder %s21, 3
      %p340 = pnand %p338, %p339
      %p341 = pneg %p340
      // Predicated region
      $region9: #{tpu_custom_call.1} parent=5 // pred_check
        _
      $region10: #{tpu_custom_call.1} parent=5 // pred_check_branch
        %343 = sbr.rel (%p340) target = $region12
      $region11: #{tpu_custom_call.1} parent=5 // pred_region
        %s344 = ssub.s32 %s21, 1
        // Predicated region
        $region13: #{tpu_custom_call.1} parent=11 // pred_check
          %p345 = pneg %p134
        $region14: #{tpu_custom_call.1} parent=11 // pred_check_branch
          %347 = sbr.rel (%p345) target = $region16
        $region15: #{tpu_custom_call.1} parent=11 // pred_region
          _
        $region16: #{tpu_custom_call.1} parent=11 // pred_fallthru
          _
        // Predicated region
        $region17: #{tpu_custom_call.1} parent=11 // pred_check
          %p348 = pneg %p155
        $region18: #{tpu_custom_call.1} parent=11 // pred_check_branch
          %350 = sbr.rel (%p348) target = $region20
        $region19: #{tpu_custom_call.1} parent=11 // pred_region
          _
        $region20: #{tpu_custom_call.1} parent=11 // pred_fallthru
          _
        // Predicated region
        $region21: #{tpu_custom_call.1} parent=11 // pred_check
          %p351 = pneg %p176
        $region22: #{tpu_custom_call.1} parent=11 // pred_check_branch
          %353 = sbr.rel (%p351) target = $region24
        $region23: #{tpu_custom_call.1} parent=11 // pred_region
          _
        $region24: #{tpu_custom_call.1} parent=11 // pred_fallthru
          _
        // Predicated region
        $region25: #{tpu_custom_call.1} parent=11 // pred_check
          %p354 = pneg %p197
        $region26: #{tpu_custom_call.1} parent=11 // pred_check_branch
          %356 = sbr.rel (%p354) target = $region28
        $region27: #{tpu_custom_call.1} parent=11 // pred_region
          _
        $region28: #{tpu_custom_call.1} parent=11 // pred_fallthru
          _
        // Predicated region
        $region29: #{tpu_custom_call.1} parent=11 // pred_check
          %p357 = pneg %p218
        $region30: #{tpu_custom_call.1} parent=11 // pred_check_branch
          %359 = sbr.rel (%p357) target = $region32
        $region31: #{tpu_custom_call.1} parent=11 // pred_region
          _
        $region32: #{tpu_custom_call.1} parent=11 // pred_fallthru
          _
        // Predicated region
        $region33: #{tpu_custom_call.1} parent=11 // pred_check
          %p360 = pneg %p239
        $region34: #{tpu_custom_call.1} parent=11 // pred_check_branch
          %362 = sbr.rel (%p360) target = $region36
        $region35: #{tpu_custom_call.1} parent=11 // pred_region
          _
        $region36: #{tpu_custom_call.1} parent=11 // pred_fallthru
          _
        // Predicated region
        $region37: #{tpu_custom_call.1} parent=11 // pred_check
          %p363 = pneg %p260
        $region38: #{tpu_custom_call.1} parent=11 // pred_check_branch
          %365 = sbr.rel (%p363) target = $region40
        $region39: #{tpu_custom_call.1} parent=11 // pred_region
          _
        $region40: #{tpu_custom_call.1} parent=11 // pred_fallthru
          _
        // Predicated region
        $region41: #{tpu_custom_call.1} parent=11 // pred_check
          %p366 = pneg %p281
        $region42: #{tpu_custom_call.1} parent=11 // pred_check_branch
          %368 = sbr.rel (%p366) target = $region44
        $region43: #{tpu_custom_call.1} parent=11 // pred_region
          _
        $region44: #{tpu_custom_call.1} parent=11 // pred_fallthru
          _
        // Predicated region
        $region45: #{tpu_custom_call.1} parent=11 // pred_check
          %p369 = pneg %p302
        $region46: #{tpu_custom_call.1} parent=11 // pred_check_branch
          %371 = sbr.rel (%p369) target = $region48
        $region47: #{tpu_custom_call.1} parent=11 // pred_region
          _
        $region48: #{tpu_custom_call.1} parent=11 // pred_fallthru
          _
      $region12: #{tpu_custom_call.1} parent=5 // pred_fallthru
        _
      %p372 = scmp.lt.s32.totalorder %s21, 2
      // Predicated region
      $region49: #{tpu_custom_call.1} parent=5 // pred_check
        %p373 = pneg %p372
      $region50: #{tpu_custom_call.1} parent=5 // pred_check_branch
        %375 = sbr.rel (%p373) target = $region52
      $region51: #{tpu_custom_call.1} parent=5 // pred_region
        // Predicated region
        $region53: #{tpu_custom_call.1} parent=51 // pred_check
          %p376 = pneg %p53
        $region54: #{tpu_custom_call.1} parent=51 // pred_check_branch
          %378 = sbr.rel (%p376) target = $region56
        $region55: #{tpu_custom_call.1} parent=51 // pred_region
          %p379 = scmp.lt.s32.totalorder %s28, 1
          %s380 = scalar_select %p379, %s28, 1
          %s381 = smul.addr %s380, 4
          %s382 = smul.addr %s381, 4
          %s383 = scalar_lea.vmem %s0, %s382
        $region56: #{tpu_custom_call.1} parent=51 // pred_fallthru
          _
        // Predicated region
        $region57: #{tpu_custom_call.1} parent=51 // pred_check
          %p384 = pneg %p79
        $region58: #{tpu_custom_call.1} parent=51 // pred_check_branch
          %386 = sbr.rel (%p384) target = $region60
        $region59: #{tpu_custom_call.1} parent=51 // pred_region
          %p387 = scmp.lt.s32.totalorder %s28, 1
          %s388 = scalar_select %p387, %s28, 1
          %s389 = scalar_lea.vmem %s1, %s388
        $region60: #{tpu_custom_call.1} parent=51 // pred_fallthru
          _
        // Predicated region
        $region61: #{tpu_custom_call.1} parent=51 // pred_check
          %p390 = pneg %p107
        $region62: #{tpu_custom_call.1} parent=51 // pred_check_branch
          %392 = sbr.rel (%p390) target = $region64
        $region63: #{tpu_custom_call.1} parent=51 // pred_region
          %s393 = smul.u32 2, %s29
          %p394 = scmp.lt.s32.totalorder %s28, 1
          %s395 = scalar_select %p394, %s28, 1
          %p396 = scmp.lt.s32.totalorder %s393, 1
          %s397 = scalar_select %p396, %s393, 1
          %s398 = smul.addr %s395, 8
          %s399 = sadd.s32 %s397, %s398
          %s400 = smul.addr %s399, 4
          %s401 = scalar_lea.vmem %s2, %s400
          %s402 = smul.u32 2, %s29
        $region64: #{tpu_custom_call.1} parent=51 // pred_fallthru
          _
      $region52: #{tpu_custom_call.1} parent=5 // pred_fallthru
        _
      %p403 = scmp.le.s32.totalorder 1, %s21
      %p404 = scmp.lt.s32.totalorder %s21, 3
      %p405 = pnand %p403, %p404
      %p406 = pneg %p405
      // Predicated region
      $region65: #{tpu_custom_call.1} parent=5 // pred_check
        _
      $region66: #{tpu_custom_call.1} parent=5 // pred_check_branch
        %408 = sbr.rel (%p405) target = $region68
      $region67: #{tpu_custom_call.1} parent=5 // pred_region
        %s409 = ssub.s32 %s21, 1
        %p410 = scmp.lt.s32.totalorder %s30, 1
        %s411 = scalar_select %p410, %s30, 1
        %s412 = smul.addr %s411, 4
        %s413 = smul.addr %s412, 4
        %s414 = scalar_lea.vmem %s0, %s413
        %p415 = pneg %p59
        %p416 = pneg %p56
        %p417 = scmp.lt.s32.totalorder %s30, 1
        %s418 = scalar_select %p417, %s30, 1
        %s419 = scalar_lea.vmem %s1, %s418
        %p420 = pneg %p85
        %p421 = pneg %p82
        %s422 = smul.u32 2, %s31
        %p423 = scmp.lt.s32.totalorder %s30, 1
        %s424 = scalar_select %p423, %s30, 1
        %p425 = scmp.lt.s32.totalorder %s422, 1
        %s426 = scalar_select %p425, %s422, 1
        %s427 = smul.addr %s424, 8
        %s428 = sadd.s32 %s426, %s427
        %s429 = smul.addr %s428, 4
        %s430 = scalar_lea.vmem %s2, %s429
        %p431 = pneg %p113
        %p432 = pneg %p110
        %p433 = pneg %p134
        %p434 = pneg %p131
        %p435 = pneg %p155
        %p436 = pneg %p152
        %p437 = pneg %p176
        %p438 = pneg %p173
        %p439 = pneg %p197
        %p440 = pneg %p194
        %p441 = pneg %p218
        %p442 = pneg %p215
        %p443 = pneg %p239
        %p444 = pneg %p236
        %p445 = pneg %p260
        %p446 = pneg %p257
        %p447 = pneg %p281
        %p448 = pneg %p278
        %p449 = pneg %p302
        %p450 = pneg %p299
        %p451 = pneg %p330
        %p452 = pneg %p327
        %s453 = sand.u32 %s317, 1
        %s454 = scalar_lea.sflag [#allocation5], %s453
        %s455 = sand.u32 %s317, 1
        %s456 = smul.addr %s455, 32
        %s457 = scalar_lea.vmem [#allocation4], %s456
        %p458 = scmp.lt.s32.totalorder %s30, 1
        %s459 = scalar_select %p458, %s30, 1
        %s460 = smul.addr %s459, 4
        %s461 = smul.addr %s460, 4
        %s462 = scalar_lea.vmem %s0, %s461
        %p463 = scmp.lt.s32.totalorder %s30, 1
        %s464 = scalar_select %p463, %s30, 1
        %s465 = scalar_lea.vmem %s1, %s464
        %s466 = smul.u32 2, %s31
        %p467 = scmp.lt.s32.totalorder %s30, 1
        %s468 = scalar_select %p467, %s30, 1
        %p469 = scmp.lt.s32.totalorder %s466, 1
        %s470 = scalar_select %p469, %s466, 1
        %s471 = smul.addr %s468, 8
        %s472 = sadd.s32 %s470, %s471
        %s473 = smul.addr %s472, 4
        %s474 = scalar_lea.vmem %s2, %s473
        %s475 = smul.u32 2, %s31
        %s476 = smul.u32 2, %s31
        %v478 = vld [vmem:[%s462] sm:$0xf]
        %v479 = vld [vmem:[%s462 + $0x4] sm:$0xf]
        %v480 = vld [vmem:[%s462 + $0x8] sm:$0xf]
        %v481 = vld [vmem:[%s462 + $0xc] sm:$0xf]
        %v482 = vld [vmem:[%s465] sm:$0x1]
        %v483 = vld [vmem:[%s474] sm:$0xff]
        %v484 = vld [vmem:[%s474 + $0x8] sm:$0xff]
        %v485 = vld [vmem:[%s474 + $0x10] sm:$0xff]
        %v486 = vld [vmem:[%s474 + $0x18] sm:$0xff]
        %v487 = vld [vmem:[%s4] sm:$0xf]
        %v488 = vld [vmem:[%s4 + $0x4] sm:$0xf]
        %v489 = vld [vmem:[%s4 + $0x8] sm:$0xf]
        %v490 = vld [vmem:[%s4 + $0xc] sm:$0xf]
        %v491 = vld [vmem:[%s4 + $0x10] sm:$0xf]
        %v492 = vld [vmem:[%s4 + $0x14] sm:$0xf]
        %v493 = vld [vmem:[%s4 + $0x18] sm:$0xf]
        %v494 = vld [vmem:[%s4 + $0x1c] sm:$0xf]
        %v495 = vld [vmem:[%s4 + $0x20] sm:$0xf]
        %v496 = vld [vmem:[%s4 + $0x24] sm:$0xf]
        %v497 = vld [vmem:[%s4 + $0x28] sm:$0xf]
        %v498 = vld [vmem:[%s4 + $0x2c] sm:$0xf]
        %v511 = vunpack.c.l.b16 %v487
        %v512 = vunpack.c.l.b16 %v488
        %v513 = vunpack.c.l.b16 %v489
        %v514 = vunpack.c.l.b16 %v490
        %v515 = vunpack.c.l.b16 %v491
        %v516 = vunpack.c.l.b16 %v492
        %v517 = vunpack.c.l.b16 %v493
        %v518 = vunpack.c.l.b16 %v494
        %v519 = vunpack.c.l.b16 %v495
        %v520 = vunpack.c.l.b16 %v496
        %v521 = vunpack.c.l.b16 %v497
        %v522 = vunpack.c.l.b16 %v498
        %v523 = vpack.c.b16 %v512, %v511
        %v524 = vpack.c.b16 %v514, %v513
        %v525 = vpack.c.b16 %v516, %v515
        %v526 = vpack.c.b16 %v518, %v517
        %v527 = vpack.c.b16 %v520, %v519
        %v528 = vpack.c.b16 %v522, %v521
        %v533 = vunpack.c.l.b16 %v483
        %v534 = vunpack.c.h.b16 %v483
        %v535 = vunpack.c.l.b16 %v484
        %v536 = vunpack.c.h.b16 %v484
        %v537 = vunpack.c.l.b16 %v485
        %v538 = vunpack.c.h.b16 %v485
        %v539 = vunpack.c.l.b16 %v486
        %v540 = vunpack.c.h.b16 %v486
        %v541 = vpack.c.b16 %v535, %v533
        %v542 = vpack.c.b16 %v536, %v534
        %v543 = vpack.c.b16 %v539, %v537
        %v544 = vpack.c.b16 %v540, %v538
        %vm549 = vcmask 261120
        %v551 = vsel %vm549, %v523, 0
        %v554 = vsel %vm549, %v524, 0
        %v557 = vsel %vm549, %v525, 0
        %v560 = vsel %vm549, %v526, 0
        %v563 = vsel %vm549, %v527, 0
        %v566 = vsel %vm549, %v528, 0
        %568 = vmatprep.subr.bf16.mxu0 %v542
        %569 = vmatpush1.bf16.msra.mxu0 %v541
        %570 = vmatprep.subr.bf16.mxu0 %v544
        %571 = vmatpush1.bf16.msra.mxu0 %v543
        %572 = vmatprep.subr.bf16.mxu0 0
        %573 = vmatpush1.bf16.msra.mxu0 0
        %574 = vmatprep.subr.bf16.mxu0 0
        %575 = vmatpush1.bf16.msra.mxu0 0
        %576 = vmatprep.subr.bf16.mxu0 0
        %577 = vmatpush1.bf16.msra.mxu0 0
        %578 = vmatprep.subr.bf16.mxu0 0
        %579 = vmatpush1.bf16.msra.mxu0 0
        %580 = vmatprep.subr.bf16.mxu0 0
        %581 = vmatpush1.bf16.msra.mxu0 0
        %582 = vmatprep.subr.bf16.mxu0 0
        %583 = vmatpush1.bf16.msra.mxu0 0
        %584 = vmatprep.subr.bf16.mxu0 0
        %585 = vmatpush1.bf16.msra.mxu0 0
        %586 = vmatprep.subr.bf16.mxu0 0
        %587 = vmatpush1.bf16.msra.mxu0 0
        %588 = vmatprep.subr.bf16.mxu0 0
        %589 = vmatpush1.bf16.msra.mxu0 0
        %590 = vmatprep.subr.bf16.mxu0 0
        %591 = vmatpush1.bf16.msra.mxu0 0
        %592 = vmatprep.subr.bf16.mxu0 0
        %593 = vmatpush1.bf16.msra.mxu0 0
        %594 = vmatprep.subr.bf16.mxu0 0
        %595 = vmatpush1.bf16.msra.mxu0 0
        %596 = vmatprep.subr.bf16.mxu0 0
        %597 = vmatpush1.bf16.msra.mxu0 0
        %598 = vmatprep.subr.bf16.mxu0 0
        %599 = vmatpush1.bf16.msra.mxu0 0
        %600 = vmatprep.mubr.bf16.mxu0 0
        %601 = vmatmul.mubr.bf16.gmra.mrb[0].mxu0 %v551
        %v602 = vpop.f32.mrb[0].mxu0
        %v603 = vadd.f32 0.0, %v602
        %v604 = vpop.f32.mrb[0].mxu0
        %v605 = vadd.f32 0.0, %v604
        %v606 = vpop.f32.mrb[0].mxu0
        %v607 = vadd.f32 0.0, %v606
        %v608 = vpop.f32.mrb[0].mxu0
        %v609 = vadd.f32 0.0, %v608
        %610 = vmatprep.mubr.bf16.mxu0 0
        %611 = vmatmul.mubr.bf16.gmra.mrb[0].mxu0 %v554
        %v612 = vpop.f32.mrb[0].mxu0
        %v613 = vadd.f32 0.0, %v612
        %v614 = vpop.f32.mrb[0].mxu0
        %v615 = vadd.f32 0.0, %v614
        %v616 = vpop.f32.mrb[0].mxu0
        %v617 = vadd.f32 0.0, %v616
        %v618 = vpop.f32.mrb[0].mxu0
        %v619 = vadd.f32 0.0, %v618
        %620 = vmatprep.mubr.bf16.mxu0 0
        %621 = vmatmul.mubr.bf16.gmra.mrb[0].mxu0 %v557
        %v622 = vpop.f32.mrb[0].mxu0
        %v623 = vadd.f32 0.0, %v622
        %v624 = vpop.f32.mrb[0].mxu0
        %v625 = vadd.f32 0.0, %v624
        %v626 = vpop.f32.mrb[0].mxu0
        %v627 = vadd.f32 0.0, %v626
        %v628 = vpop.f32.mrb[0].mxu0
        %v629 = vadd.f32 0.0, %v628
        %630 = vmatprep.mubr.bf16.mxu0 0
        %631 = vmatmul.mubr.bf16.gmra.mrb[0].mxu0 %v560
        %v632 = vpop.f32.mrb[0].mxu0
        %v633 = vadd.f32 0.0, %v632
        %v634 = vpop.f32.mrb[0].mxu0
        %v635 = vadd.f32 0.0, %v634
        %v636 = vpop.f32.mrb[0].mxu0
        %v637 = vadd.f32 0.0, %v636
        %v638 = vpop.f32.mrb[0].mxu0
        %v639 = vadd.f32 0.0, %v638
        %640 = vmatprep.mubr.bf16.mxu0 0
        %641 = vmatmul.mubr.bf16.gmra.mrb[0].mxu0 %v563
        %v642 = vpop.f32.mrb[0].mxu0
        %v643 = vadd.f32 0.0, %v642
        %v644 = vpop.f32.mrb[0].mxu0
        %v645 = vadd.f32 0.0, %v644
        %v646 = vpop.f32.mrb[0].mxu0
        %v647 = vadd.f32 0.0, %v646
        %v648 = vpop.f32.mrb[0].mxu0
        %v649 = vadd.f32 0.0, %v648
        %650 = vmatprep.mubr.bf16.mxu0 0
        %651 = vmatmul.mubr.bf16.gmra.mrb[0].mxu0 %v566
        %v652 = vpop.f32.mrb[0].mxu0
        %v653 = vadd.f32 0.0, %v652
        %v654 = vpop.f32.mrb[0].mxu0
        %v655 = vadd.f32 0.0, %v654
        %v656 = vpop.f32.mrb[0].mxu0
        %v657 = vadd.f32 0.0, %v656
        %v658 = vpop.f32.mrb[0].mxu0
        %v659 = vadd.f32 0.0, %v658
        %660 = vdwg.mxu0
        %v661 = vmul.f32 %v603, %v603
        %v662 = vmul.f32 %v605, %v605
        %v663 = vmul.f32 %v607, %v607
        %v664 = vmul.f32 %v609, %v609
        %v665 = vmul.f32 %v613, %v613
        %v666 = vmul.f32 %v615, %v615
        %v667 = vmul.f32 %v617, %v617
        %v668 = vmul.f32 %v619, %v619
        %v669 = vadd.f32 %v661, %v663
        %v670 = vadd.f32 %v669, %v665
        %v671 = vadd.f32 %v670, %v667
        %v672 = vrot.slane %v671, 4
        %v673 = vadd.f32 %v671, %v672
        %v674 = vrot.slane %v673, 2
        %v675 = vadd.f32 %v673, %v674
        %v676 = vrot.slane %v675, 1
        %v677 = vadd.f32 %v675, %v676
        %v678 = vadd.f32 %v662, %v664
        %v679 = vadd.f32 %v678, %v666
        %v680 = vadd.f32 %v679, %v668
        %v681 = vrot.slane %v680, 4
        %v682 = vadd.f32 %v680, %v681
        %v683 = vrot.slane %v682, 2
        %v684 = vadd.f32 %v682, %v683
        %v685 = vrot.slane %v684, 1
        %v686 = vadd.f32 %v684, %v685
        %v687 = vmax.f32 %v677, 1e-24
        %v688 = vmax.f32 %v686, 1e-24
        %v689 = vrsqrt.pop %v687
        %v690 = vrsqrt.pop %v688
        %v691 = vmul.f32 %v603, %v689
        %v692 = vmul.f32 %v605, %v690
        %v693 = vmul.f32 %v607, %v689
        %v694 = vmul.f32 %v609, %v690
        %v695 = vmul.f32 %v613, %v689
        %v696 = vmul.f32 %v615, %v690
        %v697 = vmul.f32 %v617, %v689
        %v698 = vmul.f32 %v619, %v690
        %v699 = vpack.c.bf16 %v693, %v691
        %v700 = vpack.c.bf16 %v694, %v692
        %v701 = vpack.c.bf16 %v697, %v695
        %v702 = vpack.c.bf16 %v698, %v696
        %v703 = vmul.f32 %v623, %v623
        %v704 = vmul.f32 %v625, %v625
        %v705 = vmul.f32 %v627, %v627
        %v706 = vmul.f32 %v629, %v629
        %v707 = vmul.f32 %v633, %v633
        %v708 = vmul.f32 %v635, %v635
        %v709 = vmul.f32 %v637, %v637
        %v710 = vmul.f32 %v639, %v639
        %v711 = vadd.f32 %v703, %v705
        %v712 = vadd.f32 %v711, %v707
        %v713 = vadd.f32 %v712, %v709
        %v714 = vrot.slane %v713, 4
        %v715 = vadd.f32 %v713, %v714
        %v716 = vrot.slane %v715, 2
        %v717 = vadd.f32 %v715, %v716
        %v718 = vrot.slane %v717, 1
        %v719 = vadd.f32 %v717, %v718
        %v720 = vadd.f32 %v704, %v706
        %v721 = vadd.f32 %v720, %v708
        %v722 = vadd.f32 %v721, %v710
        %v723 = vrot.slane %v722, 4
        %v724 = vadd.f32 %v722, %v723
        %v725 = vrot.slane %v724, 2
        %v726 = vadd.f32 %v724, %v725
        %v727 = vrot.slane %v726, 1
        %v728 = vadd.f32 %v726, %v727
        %v729 = vmax.f32 %v719, 1e-24
        %v730 = vmax.f32 %v728, 1e-24
        %v731 = vrsqrt.pop %v729
        %v732 = vrsqrt.pop %v730
        %v733 = vmul.f32 %v623, %v731
        %v734 = vmul.f32 %v625, %v732
        %v735 = vmul.f32 %v627, %v731
        %v736 = vmul.f32 %v629, %v732
        %v737 = vmul.f32 %v633, %v731
        %v738 = vmul.f32 %v635, %v732
        %v739 = vmul.f32 %v637, %v731
        %v740 = vmul.f32 %v639, %v732
        %v741 = vpack.c.bf16 %v735, %v733
        %v742 = vpack.c.bf16 %v736, %v734
        %v743 = vpack.c.bf16 %v739, %v737
        %v744 = vpack.c.bf16 %v740, %v738
        %v745 = vld [vmem:[%s7] sm:$0xff]
        %v746 = vld [vmem:[%s7 + $0x8] sm:$0xff]
        %v747 = vld [vmem:[%s7 + $0x10] sm:$0xff]
        %v748 = vld [vmem:[%s7 + $0x18] sm:$0xff]
        %750 = vset.pattern.permute.xlu0 0
        %751 = vperm.xlu0 %750, %v745
        %v752 = vpop.permute.xlu0 %751
        %755 = vset.pattern.permute.xlu0 0
        %756 = vperm.xlu0 %755, %v746
        %v757 = vpop.permute.xlu0 %756
        %760 = vset.pattern.permute.xlu0 0
        %761 = vperm.xlu0 %760, %v747
        %v762 = vpop.permute.xlu0 %761
        %765 = vset.pattern.permute.xlu0 0
        %766 = vperm.xlu0 %765, %v748
        %v767 = vpop.permute.xlu0 %766
        %v769 = vadd.f32 %v643, %v752
        %v770 = vadd.f32 %v645, %v752
        %v771 = vadd.f32 %v647, %v757
        %v772 = vadd.f32 %v649, %v757
        %v773 = vadd.f32 %v653, %v762
        %v774 = vadd.f32 %v655, %v762
        %v775 = vadd.f32 %v657, %v767
        %v776 = vadd.f32 %v659, %v767
        %v777 = vmax.f32 %v769, 0.0
        %v778 = vmax.f32 %v770, 0.0
        %v779 = vmax.f32 %v771, 0.0
        %v780 = vmax.f32 %v772, 0.0
        %v781 = vmax.f32 %v773, 0.0
        %v782 = vmax.f32 %v774, 0.0
        %v783 = vmax.f32 %v775, 0.0
        %v784 = vmax.f32 %v776, 0.0
        %v785 = vld [vmem:[%s3] sm:$0xf]
        %v786 = vld [vmem:[%s3 + $0x4] sm:$0xf]
        %v787 = vld [vmem:[%s3 + $0x8] sm:$0xf]
        %v788 = vld [vmem:[%s3 + $0xc] sm:$0xf]
        %v789 = vld [vmem:[%s3 + $0x10] sm:$0xf]
        %v790 = vld [vmem:[%s3 + $0x14] sm:$0xf]
        %v791 = vld [vmem:[%s3 + $0x18] sm:$0xf]
        %v792 = vld [vmem:[%s3 + $0x1c] sm:$0xf]
        %v793 = vld [vmem:[%s3 + $0x20] sm:$0xf]
        %v794 = vld [vmem:[%s3 + $0x24] sm:$0xf]
        %v795 = vld [vmem:[%s3 + $0x28] sm:$0xf]
        %v796 = vld [vmem:[%s3 + $0x2c] sm:$0xf]
        %v797 = vld [vmem:[%s3 + $0x30] sm:$0xf]
        %v798 = vld [vmem:[%s3 + $0x34] sm:$0xf]
        %v799 = vld [vmem:[%s3 + $0x38] sm:$0xf]
        %v800 = vld [vmem:[%s3 + $0x3c] sm:$0xf]
        %v817 = vunpack.c.l.b16 %v785
        %v818 = vunpack.c.l.b16 %v786
        %v819 = vunpack.c.l.b16 %v787
        %v820 = vunpack.c.l.b16 %v788
        %v821 = vunpack.c.l.b16 %v789
        %v822 = vunpack.c.l.b16 %v790
        %v823 = vunpack.c.l.b16 %v791
        %v824 = vunpack.c.l.b16 %v792
        %v825 = vunpack.c.l.b16 %v793
        %v826 = vunpack.c.l.b16 %v794
        %v827 = vunpack.c.l.b16 %v795
        %v828 = vunpack.c.l.b16 %v796
        %v829 = vunpack.c.l.b16 %v797
        %v830 = vunpack.c.l.b16 %v798
        %v831 = vunpack.c.l.b16 %v799
        %v832 = vunpack.c.l.b16 %v800
        %v833 = vpack.c.b16 %v818, %v817
        %v834 = vpack.c.b16 %v820, %v819
        %v835 = vpack.c.b16 %v822, %v821
        %v836 = vpack.c.b16 %v824, %v823
        %v837 = vpack.c.b16 %v826, %v825
        %v838 = vpack.c.b16 %v828, %v827
        %v839 = vpack.c.b16 %v830, %v829
        %v840 = vpack.c.b16 %v832, %v831
        %v845 = vunpack.c.l.b16 %v478
        %v846 = vunpack.c.l.b16 %v479
        %v847 = vunpack.c.l.b16 %v480
        %v848 = vunpack.c.l.b16 %v481
        %v849 = vpack.c.b16 %v846, %v845
        %v850 = vpack.c.b16 %v848, %v847
        %v854 = vsel %vm549, %v833, 0
        %v857 = vsel %vm549, %v834, 0
        %v860 = vsel %vm549, %v835, 0
        %v863 = vsel %vm549, %v836, 0
        %v866 = vsel %vm549, %v837, 0
        %v869 = vsel %vm549, %v838, 0
        %v872 = vsel %vm549, %v839, 0
        %v875 = vsel %vm549, %v840, 0
        %877 = vmatprep.subr.bf16.mxu0 0
        %878 = vmatpush1.bf16.msra.mxu0 %v849
        %879 = vmatprep.subr.bf16.mxu0 0
        %880 = vmatpush1.bf16.msra.mxu0 %v850
        %881 = vmatprep.subr.bf16.mxu0 0
        %882 = vmatpush1.bf16.msra.mxu0 0
        %883 = vmatprep.subr.bf16.mxu0 0
        %884 = vmatpush1.bf16.msra.mxu0 0
        %885 = vmatprep.subr.bf16.mxu0 0
        %886 = vmatpush1.bf16.msra.mxu0 0
        %887 = vmatprep.subr.bf16.mxu0 0
        %888 = vmatpush1.bf16.msra.mxu0 0
        %889 = vmatprep.subr.bf16.mxu0 0
        %890 = vmatpush1.bf16.msra.mxu0 0
        %891 = vmatprep.subr.bf16.mxu0 0
        %892 = vmatpush1.bf16.msra.mxu0 0
        %893 = vmatprep.subr.bf16.mxu0 0
        %894 = vmatpush1.bf16.msra.mxu0 0
        %895 = vmatprep.subr.bf16.mxu0 0
        %896 = vmatpush1.bf16.msra.mxu0 0
        %897 = vmatprep.subr.bf16.mxu0 0
        %898 = vmatpush1.bf16.msra.mxu0 0
        %899 = vmatprep.subr.bf16.mxu0 0
        %900 = vmatpush1.bf16.msra.mxu0 0
        %901 = vmatprep.subr.bf16.mxu0 0
        %902 = vmatpush1.bf16.msra.mxu0 0
        %903 = vmatprep.subr.bf16.mxu0 0
        %904 = vmatpush1.bf16.msra.mxu0 0
        %905 = vmatprep.subr.bf16.mxu0 0
        %906 = vmatpush1.bf16.msra.mxu0 0
        %907 = vmatprep.subr.bf16.mxu0 0
        %908 = vmatpush1.bf16.msra.mxu0 0
        %909 = vmatprep.mubr.bf16.mxu0 0
        %910 = vmatmul.mubr.bf16.gmra.mrb[0].mxu0 %v854
        %v911 = vpop.f32.mrb[0].mxu0
        %v912 = vadd.f32 0.0, %v911
        %v913 = vpop.f32.mrb[0].mxu0
        %v914 = vpop.f32.mrb[0].mxu0
        %v915 = vadd.f32 0.0, %v914
        %v916 = vpop.f32.mrb[0].mxu0
        %917 = vmatprep.mubr.bf16.mxu0 0
        %918 = vmatmul.mubr.bf16.gmra.mrb[0].mxu0 %v857
        %v919 = vpop.f32.mrb[0].mxu0
        %v920 = vadd.f32 0.0, %v919
        %v921 = vpop.f32.mrb[0].mxu0
        %v922 = vpop.f32.mrb[0].mxu0
        %v923 = vadd.f32 0.0, %v922
        %v924 = vpop.f32.mrb[0].mxu0
        %925 = vmatprep.mubr.bf16.mxu0 0
        %926 = vmatmul.mubr.bf16.gmra.mrb[0].mxu0 %v860
        %v927 = vpop.f32.mrb[0].mxu0
        %v928 = vadd.f32 0.0, %v927
        %v929 = vpop.f32.mrb[0].mxu0
        %v930 = vpop.f32.mrb[0].mxu0
        %v931 = vadd.f32 0.0, %v930
        %v932 = vpop.f32.mrb[0].mxu0
        %933 = vmatprep.mubr.bf16.mxu0 0
        %934 = vmatmul.mubr.bf16.gmra.mrb[0].mxu0 %v863
        %v935 = vpop.f32.mrb[0].mxu0
        %v936 = vadd.f32 0.0, %v935
        %v937 = vpop.f32.mrb[0].mxu0
        %v938 = vpop.f32.mrb[0].mxu0
        %v939 = vadd.f32 0.0, %v938
        %v940 = vpop.f32.mrb[0].mxu0
        %941 = vmatprep.mubr.bf16.mxu0 0
        %942 = vmatmul.mubr.bf16.gmra.mrb[0].mxu0 %v866
        %v943 = vpop.f32.mrb[0].mxu0
        %v944 = vadd.f32 0.0, %v943
        %v945 = vpop.f32.mrb[0].mxu0
        %v946 = vpop.f32.mrb[0].mxu0
        %v947 = vadd.f32 0.0, %v946
        %v948 = vpop.f32.mrb[0].mxu0
        %949 = vmatprep.mubr.bf16.mxu0 0
        %950 = vmatmul.mubr.bf16.gmra.mrb[0].mxu0 %v869
        %v951 = vpop.f32.mrb[0].mxu0
        %v952 = vadd.f32 0.0, %v951
        %v953 = vpop.f32.mrb[0].mxu0
        %v954 = vpop.f32.mrb[0].mxu0
        %v955 = vadd.f32 0.0, %v954
        %v956 = vpop.f32.mrb[0].mxu0
        %957 = vmatprep.mubr.bf16.mxu0 0
        %958 = vmatmul.mubr.bf16.gmra.mrb[0].mxu0 %v872
        %v959 = vpop.f32.mrb[0].mxu0
        %v960 = vadd.f32 0.0, %v959
        %v961 = vpop.f32.mrb[0].mxu0
        %v962 = vpop.f32.mrb[0].mxu0
        %v963 = vadd.f32 0.0, %v962
        %v964 = vpop.f32.mrb[0].mxu0
        %965 = vmatprep.mubr.bf16.mxu0 0
        %966 = vmatmul.mubr.bf16.gmra.mrb[0].mxu0 %v875
        %v967 = vpop.f32.mrb[0].mxu0
        %v968 = vadd.f32 0.0, %v967
        %v969 = vpop.f32.mrb[0].mxu0
        %v970 = vpop.f32.mrb[0].mxu0
        %v971 = vadd.f32 0.0, %v970
        %v972 = vpop.f32.mrb[0].mxu0
        %973 = vdwg.mxu0
        %v975 = vlaneseq
        %v976 = vshrl.u32 %v975, 7
        %v977 = vsub.s32 0, %v976
        %v978 = vrot.slane %v482, %v977
        %v980 = vmul.f32 %v912, %v978
        %v981 = vmul.f32 %v915, %v978
        %v982 = vmul.f32 %v920, %v978
        %v983 = vmul.f32 %v923, %v978
        %v984 = vmul.f32 %v928, %v978
        %v985 = vmul.f32 %v931, %v978
        %v986 = vmul.f32 %v936, %v978
        %v987 = vmul.f32 %v939, %v978
        %v988 = vsub.f32 1.0, %v482
        %v990 = vlaneseq
        %v991 = vshrl.u32 %v990, 7
        %v992 = vsub.s32 0, %v991
        %v993 = vrot.slane %v988, %v992
        %v995 = vmul.f32 %v944, %v993
        %v996 = vmul.f32 %v947, %v993
        %v997 = vmul.f32 %v952, %v993
        %v998 = vmul.f32 %v955, %v993
        %v999 = vmul.f32 %v960, %v993
        %v1000 = vmul.f32 %v963, %v993
        %v1001 = vmul.f32 %v968, %v993
        %v1002 = vmul.f32 %v971, %v993
        %v1003 = vmul.f32 %v980, %v980
        %v1004 = vmul.f32 %v981, %v981
        %v1005 = vmul.f32 %v982, %v982
        %v1006 = vmul.f32 %v983, %v983
        %v1007 = vadd.f32 %v1003, %v1004
        %v1008 = vadd.f32 %v1007, %v1005
        %v1009 = vadd.f32 %v1008, %v1006
        %v1010 = vrot.slane %v1009, 4
        %v1011 = vadd.f32 %v1009, %v1010
        %v1012 = vrot.slane %v1011, 2
        %v1013 = vadd.f32 %v1011, %v1012
        %v1014 = vrot.slane %v1013, 1
        %v1015 = vadd.f32 %v1013, %v1014
        %v1016 = vmax.f32 %v1015, 1e-24
        %v1017 = vrsqrt.pop %v1016
        %v1018 = vmul.f32 %v980, %v1017
        %v1019 = vmul.f32 %v981, %v1017
        %v1020 = vmul.f32 %v982, %v1017
        %v1021 = vmul.f32 %v983, %v1017
        %v1022 = vpack.c.bf16 %v1019, %v1018
        %v1023 = vpack.c.bf16 %v1021, %v1020
        %v1024 = vld [vmem:[%s5] sm:$0xff]
        %v1025 = vld [vmem:[%s5 + $0x8] sm:$0xff]
        %v1026 = vld [vmem:[%s5 + $0x10] sm:$0xff]
        %v1027 = vld [vmem:[%s5 + $0x18] sm:$0xff]
        %1029 = vset.pattern.permute.xlu0 0
        %1030 = vperm.xlu0 %1029, %v1024
        %v1031 = vpop.permute.xlu0 %1030
        %1034 = vset.pattern.permute.xlu0 0
        %1035 = vperm.xlu0 %1034, %v1025
        %v1036 = vpop.permute.xlu0 %1035
        %1039 = vset.pattern.permute.xlu0 0
        %1040 = vperm.xlu0 %1039, %v1026
        %v1041 = vpop.permute.xlu0 %1040
        %1044 = vset.pattern.permute.xlu0 0
        %1045 = vperm.xlu0 %1044, %v1027
        %v1046 = vpop.permute.xlu0 %1045
        %v1048 = vadd.f32 %v984, %v1031
        %v1049 = vadd.f32 %v985, %v1036
        %v1050 = vadd.f32 %v986, %v1041
        %v1051 = vadd.f32 %v987, %v1046
        %v1052 = vmax.f32 %v1048, 0.0
        %v1053 = vmax.f32 %v1049, 0.0
        %v1054 = vmax.f32 %v1050, 0.0
        %v1055 = vmax.f32 %v1051, 0.0
        %v1056 = vpack.c.bf16 %v1053, %v1052
        %v1057 = vpack.c.bf16 %v1055, %v1054
        %1058 = vxpose.xlu0.c.b16.start [1/8] %v1022, 128
        %1059 = vxpose.xlu0.c.b16.cont [2/8] %v1023, 128
        %1060 = vxpose.xlu0.c.b16.cont [3/8] 0, 128
        %1061 = vxpose.xlu0.c.b16.cont [4/8] 0, 128
        %1062 = vxpose.xlu0.c.b16.cont [5/8] 0, 128
        %1063 = vxpose.xlu0.c.b16.cont [6/8] 0, 128
        %1064 = vxpose.xlu0.c.b16.cont [7/8] 0, 128
        %1065 = vxpose.xlu0.c.b16.end [8/8] 0, 128
        %v1066 = vpop.trf.xlu0
        %v1067 = vpop.trf.xlu0
        %v1068 = vpop.trf.xlu0
        %v1069 = vpop.trf.xlu0
        %v1070 = vpop.trf.xlu0
        %v1071 = vpop.trf.xlu0
        %v1072 = vpop.trf.xlu0
        %v1073 = vpop.trf.xlu0
        %v1075 = vsel %vm549, %v1066, 0
        %v1078 = vsel %vm549, %v1067, 0
        %v1081 = vsel %vm549, %v1068, 0
        %v1084 = vsel %vm549, %v1069, 0
        %v1087 = vsel %vm549, %v1070, 0
        %v1090 = vsel %vm549, %v1071, 0
        %v1093 = vsel %vm549, %v1072, 0
        %v1096 = vsel %vm549, %v1073, 0
        %1098 = vmatprep.subr.bf16.mxu0 %v700
        %1099 = vmatpush1.bf16.msra.mxu0 %v699
        %1100 = vmatprep.subr.bf16.mxu0 %v702
        %1101 = vmatpush1.bf16.msra.mxu0 %v701
        %1102 = vmatprep.subr.bf16.mxu0 0
        %1103 = vmatpush1.bf16.msra.mxu0 0
        %1104 = vmatprep.subr.bf16.mxu0 0
        %1105 = vmatpush1.bf16.msra.mxu0 0
        %1106 = vmatprep.subr.bf16.mxu0 0
        %1107 = vmatpush1.bf16.msra.mxu0 0
        %1108 = vmatprep.subr.bf16.mxu0 0
        %1109 = vmatpush1.bf16.msra.mxu0 0
        %1110 = vmatprep.subr.bf16.mxu0 0
        %1111 = vmatpush1.bf16.msra.mxu0 0
        %1112 = vmatprep.subr.bf16.mxu0 0
        %1113 = vmatpush1.bf16.msra.mxu0 0
        %1114 = vmatprep.subr.bf16.mxu0 0
        %1115 = vmatpush1.bf16.msra.mxu0 0
        %1116 = vmatprep.subr.bf16.mxu0 0
        %1117 = vmatpush1.bf16.msra.mxu0 0
        %1118 = vmatprep.subr.bf16.mxu0 0
        %1119 = vmatpush1.bf16.msra.mxu0 0
        %1120 = vmatprep.subr.bf16.mxu0 0
        %1121 = vmatpush1.bf16.msra.mxu0 0
        %1122 = vmatprep.subr.bf16.mxu0 0
        %1123 = vmatpush1.bf16.msra.mxu0 0
        %1124 = vmatprep.subr.bf16.mxu0 0
        %1125 = vmatpush1.bf16.msra.mxu0 0
        %1126 = vmatprep.subr.bf16.mxu0 0
        %1127 = vmatpush1.bf16.msra.mxu0 0
        %1128 = vmatprep.subr.bf16.mxu0 0
        %1129 = vmatpush1.bf16.msra.mxu0 0
        %1130 = vmatprep.mubr.bf16.mxu0 0
        %1131 = vmatmul.mubr.bf16.gmra.mrb[0].mxu0 %v1075
        %v1132 = vpop.f32.mrb[0].mxu0
        %v1133 = vadd.f32 0.0, %v1132
        %v1134 = vpop.f32.mrb[0].mxu0
        %v1135 = vadd.f32 0.0, %v1134
        %v1136 = vpop.f32.mrb[0].mxu0
        %v1137 = vadd.f32 0.0, %v1136
        %v1138 = vpop.f32.mrb[0].mxu0
        %v1139 = vadd.f32 0.0, %v1138
        %1140 = vmatprep.mubr.bf16.mxu0 0
        %1141 = vmatmul.mubr.bf16.gmra.mrb[0].mxu0 %v1078
        %v1142 = vpop.f32.mrb[0].mxu0
        %v1143 = vadd.f32 0.0, %v1142
        %v1144 = vpop.f32.mrb[0].mxu0
        %v1145 = vadd.f32 0.0, %v1144
        %v1146 = vpop.f32.mrb[0].mxu0
        %v1147 = vadd.f32 0.0, %v1146
        %v1148 = vpop.f32.mrb[0].mxu0
        %v1149 = vadd.f32 0.0, %v1148
        %1150 = vmatprep.mubr.bf16.mxu0 0
        %1151 = vmatmul.mubr.bf16.gmra.mrb[0].mxu0 %v1081
        %v1152 = vpop.f32.mrb[0].mxu0
        %v1153 = vadd.f32 0.0, %v1152
        %v1154 = vpop.f32.mrb[0].mxu0
        %v1155 = vadd.f32 0.0, %v1154
        %v1156 = vpop.f32.mrb[0].mxu0
        %v1157 = vadd.f32 0.0, %v1156
        %v1158 = vpop.f32.mrb[0].mxu0
        %v1159 = vadd.f32 0.0, %v1158
        %1160 = vmatprep.mubr.bf16.mxu0 0
        %1161 = vmatmul.mubr.bf16.gmra.mrb[0].mxu0 %v1084
        %v1162 = vpop.f32.mrb[0].mxu0
        %v1163 = vadd.f32 0.0, %v1162
        %v1164 = vpop.f32.mrb[0].mxu0
        %v1165 = vadd.f32 0.0, %v1164
        %v1166 = vpop.f32.mrb[0].mxu0
        %v1167 = vadd.f32 0.0, %v1166
        %v1168 = vpop.f32.mrb[0].mxu0
        %v1169 = vadd.f32 0.0, %v1168
        %1170 = vmatprep.mubr.bf16.mxu0 0
        %1171 = vmatmul.mubr.bf16.gmra.mrb[0].mxu0 %v1087
        %v1172 = vpop.f32.mrb[0].mxu0
        %v1173 = vadd.f32 0.0, %v1172
        %v1174 = vpop.f32.mrb[0].mxu0
        %v1175 = vadd.f32 0.0, %v1174
        %v1176 = vpop.f32.mrb[0].mxu0
        %v1177 = vadd.f32 0.0, %v1176
        %v1178 = vpop.f32.mrb[0].mxu0
        %v1179 = vadd.f32 0.0, %v1178
        %1180 = vmatprep.mubr.bf16.mxu0 0
        %1181 = vmatmul.mubr.bf16.gmra.mrb[0].mxu0 %v1090
        %v1182 = vpop.f32.mrb[0].mxu0
        %v1183 = vadd.f32 0.0, %v1182
        %v1184 = vpop.f32.mrb[0].mxu0
        %v1185 = vadd.f32 0.0, %v1184
        %v1186 = vpop.f32.mrb[0].mxu0
        %v1187 = vadd.f32 0.0, %v1186
        %v1188 = vpop.f32.mrb[0].mxu0
        %v1189 = vadd.f32 0.0, %v1188
        %1190 = vmatprep.mubr.bf16.mxu0 0
        %1191 = vmatmul.mubr.bf16.gmra.mrb[0].mxu0 %v1093
        %v1192 = vpop.f32.mrb[0].mxu0
        %v1193 = vadd.f32 0.0, %v1192
        %v1194 = vpop.f32.mrb[0].mxu0
        %v1195 = vadd.f32 0.0, %v1194
        %v1196 = vpop.f32.mrb[0].mxu0
        %v1197 = vadd.f32 0.0, %v1196
        %v1198 = vpop.f32.mrb[0].mxu0
        %v1199 = vadd.f32 0.0, %v1198
        %1200 = vmatprep.mubr.bf16.mxu0 0
        %1201 = vmatmul.mubr.bf16.gmra.mrb[0].mxu0 %v1096
        %v1202 = vpop.f32.mrb[0].mxu0
        %v1203 = vadd.f32 0.0, %v1202
        %v1204 = vpop.f32.mrb[0].mxu0
        %v1205 = vadd.f32 0.0, %v1204
        %v1206 = vpop.f32.mrb[0].mxu0
        %v1207 = vadd.f32 0.0, %v1206
        %v1208 = vpop.f32.mrb[0].mxu0
        %v1209 = vadd.f32 0.0, %v1208
        %1210 = vdwg.mxu0
        %v1211 = vld [vmem:[%s8] sm:$0xf]
        %v1212 = vld [vmem:[%s8 + $0x4] sm:$0xf]
        %v1215 = vunpack.c.l.b16 %v1211
        %v1216 = vunpack.c.l.b16 %v1212
        %v1217 = vpack.c.b16 %v1216, %v1215
        %v1219 = vsel %vm549, %v1217, 0
        %1221 = vmatprep.subr.bf16.mxu0 0
        %1222 = vmatpush1.bf16.msra.mxu0 %v1056
        %1223 = vmatprep.subr.bf16.mxu0 0
        %1224 = vmatpush1.bf16.msra.mxu0 %v1057
        %1225 = vmatprep.subr.bf16.mxu0 0
        %1226 = vmatpush1.bf16.msra.mxu0 0
        %1227 = vmatprep.subr.bf16.mxu0 0
        %1228 = vmatpush1.bf16.msra.mxu0 0
        %1229 = vmatprep.subr.bf16.mxu0 0
        %1230 = vmatpush1.bf16.msra.mxu0 0
        %1231 = vmatprep.subr.bf16.mxu0 0
        %1232 = vmatpush1.bf16.msra.mxu0 0
        %1233 = vmatprep.subr.bf16.mxu0 0
        %1234 = vmatpush1.bf16.msra.mxu0 0
        %1235 = vmatprep.subr.bf16.mxu0 0
        %1236 = vmatpush1.bf16.msra.mxu0 0
        %1237 = vmatprep.subr.bf16.mxu0 0
        %1238 = vmatpush1.bf16.msra.mxu0 0
        %1239 = vmatprep.subr.bf16.mxu0 0
        %1240 = vmatpush1.bf16.msra.mxu0 0
        %1241 = vmatprep.subr.bf16.mxu0 0
        %1242 = vmatpush1.bf16.msra.mxu0 0
        %1243 = vmatprep.subr.bf16.mxu0 0
        %1244 = vmatpush1.bf16.msra.mxu0 0
        %1245 = vmatprep.subr.bf16.mxu0 0
        %1246 = vmatpush1.bf16.msra.mxu0 0
        %1247 = vmatprep.subr.bf16.mxu0 0
        %1248 = vmatpush1.bf16.msra.mxu0 0
        %1249 = vmatprep.subr.bf16.mxu0 0
        %1250 = vmatpush1.bf16.msra.mxu0 0
        %1251 = vmatprep.subr.bf16.mxu0 0
        %1252 = vmatpush1.bf16.msra.mxu0 0
        %1253 = vmatprep.mubr.bf16.mxu0 0
        %1254 = vmatmul.mubr.bf16.gmra.mrb[0].mxu0 %v1219
        %v1255 = vpop.f32.mrb[0].mxu0
        %v1256 = vadd.f32 0.0, %v1255
        %v1257 = vpop.f32.mrb[0].mxu0
        %v1258 = vpop.f32.mrb[0].mxu0
        %v1259 = vadd.f32 0.0, %v1258
        %v1260 = vpop.f32.mrb[0].mxu0
        %1261 = vdwg.mxu0
        %v1262 = vpack.c.bf16 %v1259, %v1256
        %v1263 = vpack.c.bf16 %v1137, %v1133
        %v1264 = vpack.c.bf16 %v1139, %v1135
        %v1265 = vpack.c.bf16 %v1147, %v1143
        %v1266 = vpack.c.bf16 %v1149, %v1145
        %v1267 = vpack.c.bf16 %v1157, %v1153
        %v1268 = vpack.c.bf16 %v1159, %v1155
        %v1269 = vpack.c.bf16 %v1167, %v1163
        %v1270 = vpack.c.bf16 %v1169, %v1165
        %v1271 = vpack.c.bf16 %v1177, %v1173
        %v1272 = vpack.c.bf16 %v1179, %v1175
        %v1273 = vpack.c.bf16 %v1187, %v1183
        %v1274 = vpack.c.bf16 %v1189, %v1185
        %v1275 = vpack.c.bf16 %v1197, %v1193
        %v1276 = vpack.c.bf16 %v1199, %v1195
        %v1277 = vpack.c.bf16 %v1207, %v1203
        %v1278 = vpack.c.bf16 %v1209, %v1205
        %v1279 = vmul.f32 %v995, %v995
        %v1280 = vmul.f32 %v996, %v996
        %v1281 = vmul.f32 %v997, %v997
        %v1282 = vmul.f32 %v998, %v998
        %v1283 = vadd.f32 %v1279, %v1280
        %v1284 = vadd.f32 %v1283, %v1281
        %v1285 = vadd.f32 %v1284, %v1282
        %v1286 = vrot.slane %v1285, 4
        %v1287 = vadd.f32 %v1285, %v1286
        %v1288 = vrot.slane %v1287, 2
        %v1289 = vadd.f32 %v1287, %v1288
        %v1290 = vrot.slane %v1289, 1
        %v1291 = vadd.f32 %v1289, %v1290
        %v1292 = vmax.f32 %v1291, 1e-24
        %v1293 = vrsqrt.pop %v1292
        %v1294 = vmul.f32 %v995, %v1293
        %v1295 = vmul.f32 %v996, %v1293
        %v1296 = vmul.f32 %v997, %v1293
        %v1297 = vmul.f32 %v998, %v1293
        %v1298 = vpack.c.bf16 %v1295, %v1294
        %v1299 = vpack.c.bf16 %v1297, %v1296
        %v1300 = vld [vmem:[%s6] sm:$0xff]
        %v1301 = vld [vmem:[%s6 + $0x8] sm:$0xff]
        %v1302 = vld [vmem:[%s6 + $0x10] sm:$0xff]
        %v1303 = vld [vmem:[%s6 + $0x18] sm:$0xff]
        %1305 = vset.pattern.permute.xlu0 0
        %1306 = vperm.xlu0 %1305, %v1300
        %v1307 = vpop.permute.xlu0 %1306
        %1310 = vset.pattern.permute.xlu0 0
        %1311 = vperm.xlu0 %1310, %v1301
        %v1312 = vpop.permute.xlu0 %1311
        %1315 = vset.pattern.permute.xlu0 0
        %1316 = vperm.xlu0 %1315, %v1302
        %v1317 = vpop.permute.xlu0 %1316
        %1320 = vset.pattern.permute.xlu0 0
        %1321 = vperm.xlu0 %1320, %v1303
        %v1322 = vpop.permute.xlu0 %1321
        %v1324 = vadd.f32 %v999, %v1307
        %v1325 = vadd.f32 %v1000, %v1312
        %v1326 = vadd.f32 %v1001, %v1317
        %v1327 = vadd.f32 %v1002, %v1322
        %v1328 = vmax.f32 %v1324, 0.0
        %v1329 = vmax.f32 %v1325, 0.0
        %v1330 = vmax.f32 %v1326, 0.0
        %v1331 = vmax.f32 %v1327, 0.0
        %v1332 = vpack.c.bf16 %v1329, %v1328
        %v1333 = vpack.c.bf16 %v1331, %v1330
        %1334 = vxpose.xlu0.c.b16.start [1/8] %v1298, 128
        %1335 = vxpose.xlu0.c.b16.cont [2/8] %v1299, 128
        %1336 = vxpose.xlu0.c.b16.cont [3/8] 0, 128
        %1337 = vxpose.xlu0.c.b16.cont [4/8] 0, 128
        %1338 = vxpose.xlu0.c.b16.cont [5/8] 0, 128
        %1339 = vxpose.xlu0.c.b16.cont [6/8] 0, 128
        %1340 = vxpose.xlu0.c.b16.cont [7/8] 0, 128
        %1341 = vxpose.xlu0.c.b16.end [8/8] 0, 128
        %v1342 = vpop.trf.xlu0
        %v1343 = vpop.trf.xlu0
        %v1344 = vpop.trf.xlu0
        %v1345 = vpop.trf.xlu0
        %v1346 = vpop.trf.xlu0
        %v1347 = vpop.trf.xlu0
        %v1348 = vpop.trf.xlu0
        %v1349 = vpop.trf.xlu0
        %v1351 = vsel %vm549, %v1342, 0
        %v1354 = vsel %vm549, %v1343, 0
        %v1357 = vsel %vm549, %v1344, 0
        %v1360 = vsel %vm549, %v1345, 0
        %v1363 = vsel %vm549, %v1346, 0
        %v1366 = vsel %vm549, %v1347, 0
        %v1369 = vsel %vm549, %v1348, 0
        %v1372 = vsel %vm549, %v1349, 0
        %1374 = vmatprep.subr.bf16.mxu0 %v742
        %1375 = vmatpush1.bf16.msra.mxu0 %v741
        %1376 = vmatprep.subr.bf16.mxu0 %v744
        %1377 = vmatpush1.bf16.msra.mxu0 %v743
        %1378 = vmatprep.subr.bf16.mxu0 0
        %1379 = vmatpush1.bf16.msra.mxu0 0
        %1380 = vmatprep.subr.bf16.mxu0 0
        %1381 = vmatpush1.bf16.msra.mxu0 0
        %1382 = vmatprep.subr.bf16.mxu0 0
        %1383 = vmatpush1.bf16.msra.mxu0 0
        %1384 = vmatprep.subr.bf16.mxu0 0
        %1385 = vmatpush1.bf16.msra.mxu0 0
        %1386 = vmatprep.subr.bf16.mxu0 0
        %1387 = vmatpush1.bf16.msra.mxu0 0
        %1388 = vmatprep.subr.bf16.mxu0 0
        %1389 = vmatpush1.bf16.msra.mxu0 0
        %1390 = vmatprep.subr.bf16.mxu0 0
        %1391 = vmatpush1.bf16.msra.mxu0 0
        %1392 = vmatprep.subr.bf16.mxu0 0
        %1393 = vmatpush1.bf16.msra.mxu0 0
        %1394 = vmatprep.subr.bf16.mxu0 0
        %1395 = vmatpush1.bf16.msra.mxu0 0
        %1396 = vmatprep.subr.bf16.mxu0 0
        %1397 = vmatpush1.bf16.msra.mxu0 0
        %1398 = vmatprep.subr.bf16.mxu0 0
        %1399 = vmatpush1.bf16.msra.mxu0 0
        %1400 = vmatprep.subr.bf16.mxu0 0
        %1401 = vmatpush1.bf16.msra.mxu0 0
        %1402 = vmatprep.subr.bf16.mxu0 0
        %1403 = vmatpush1.bf16.msra.mxu0 0
        %1404 = vmatprep.subr.bf16.mxu0 0
        %1405 = vmatpush1.bf16.msra.mxu0 0
        %1406 = vmatprep.mubr.bf16.mxu0 0
        %1407 = vmatmul.mubr.bf16.gmra.mrb[0].mxu0 %v1351
        %v1408 = vpop.f32.mrb[0].mxu0
        %v1409 = vadd.f32 0.0, %v1408
        %v1410 = vpop.f32.mrb[0].mxu0
        %v1411 = vadd.f32 0.0, %v1410
        %v1412 = vpop.f32.mrb[0].mxu0
        %v1413 = vadd.f32 0.0, %v1412
        %v1414 = vpop.f32.mrb[0].mxu0
        %v1415 = vadd.f32 0.0, %v1414
        %1416 = vmatprep.mubr.bf16.mxu0 0
        %1417 = vmatmul.mubr.bf16.gmra.mrb[0].mxu0 %v1354
        %v1418 = vpop.f32.mrb[0].mxu0
        %v1419 = vadd.f32 0.0, %v1418
        %v1420 = vpop.f32.mrb[0].mxu0
        %v1421 = vadd.f32 0.0, %v1420
        %v1422 = vpop.f32.mrb[0].mxu0
        %v1423 = vadd.f32 0.0, %v1422
        %v1424 = vpop.f32.mrb[0].mxu0
        %v1425 = vadd.f32 0.0, %v1424
        %1426 = vmatprep.mubr.bf16.mxu0 0
        %1427 = vmatmul.mubr.bf16.gmra.mrb[0].mxu0 %v1357
        %v1428 = vpop.f32.mrb[0].mxu0
        %v1429 = vadd.f32 0.0, %v1428
        %v1430 = vpop.f32.mrb[0].mxu0
        %v1431 = vadd.f32 0.0, %v1430
        %v1432 = vpop.f32.mrb[0].mxu0
        %v1433 = vadd.f32 0.0, %v1432
        %v1434 = vpop.f32.mrb[0].mxu0
        %v1435 = vadd.f32 0.0, %v1434
        %1436 = vmatprep.mubr.bf16.mxu0 0
        %1437 = vmatmul.mubr.bf16.gmra.mrb[0].mxu0 %v1360
        %v1438 = vpop.f32.mrb[0].mxu0
        %v1439 = vadd.f32 0.0, %v1438
        %v1440 = vpop.f32.mrb[0].mxu0
        %v1441 = vadd.f32 0.0, %v1440
        %v1442 = vpop.f32.mrb[0].mxu0
        %v1443 = vadd.f32 0.0, %v1442
        %v1444 = vpop.f32.mrb[0].mxu0
        %v1445 = vadd.f32 0.0, %v1444
        %1446 = vmatprep.mubr.bf16.mxu0 0
        %1447 = vmatmul.mubr.bf16.gmra.mrb[0].mxu0 %v1363
        %v1448 = vpop.f32.mrb[0].mxu0
        %v1449 = vadd.f32 0.0, %v1448
        %v1450 = vpop.f32.mrb[0].mxu0
        %v1451 = vadd.f32 0.0, %v1450
        %v1452 = vpop.f32.mrb[0].mxu0
        %v1453 = vadd.f32 0.0, %v1452
        %v1454 = vpop.f32.mrb[0].mxu0
        %v1455 = vadd.f32 0.0, %v1454
        %1456 = vmatprep.mubr.bf16.mxu0 0
        %1457 = vmatmul.mubr.bf16.gmra.mrb[0].mxu0 %v1366
        %v1458 = vpop.f32.mrb[0].mxu0
        %v1459 = vadd.f32 0.0, %v1458
        %v1460 = vpop.f32.mrb[0].mxu0
        %v1461 = vadd.f32 0.0, %v1460
        %v1462 = vpop.f32.mrb[0].mxu0
        %v1463 = vadd.f32 0.0, %v1462
        %v1464 = vpop.f32.mrb[0].mxu0
        %v1465 = vadd.f32 0.0, %v1464
        %1466 = vmatprep.mubr.bf16.mxu0 0
        %1467 = vmatmul.mubr.bf16.gmra.mrb[0].mxu0 %v1369
        %v1468 = vpop.f32.mrb[0].mxu0
        %v1469 = vadd.f32 0.0, %v1468
        %v1470 = vpop.f32.mrb[0].mxu0
        %v1471 = vadd.f32 0.0, %v1470
        %v1472 = vpop.f32.mrb[0].mxu0
        %v1473 = vadd.f32 0.0, %v1472
        %v1474 = vpop.f32.mrb[0].mxu0
        %v1475 = vadd.f32 0.0, %v1474
        %1476 = vmatprep.mubr.bf16.mxu0 0
        %1477 = vmatmul.mubr.bf16.gmra.mrb[0].mxu0 %v1372
        %v1478 = vpop.f32.mrb[0].mxu0
        %v1479 = vadd.f32 0.0, %v1478
        %v1480 = vpop.f32.mrb[0].mxu0
        %v1481 = vadd.f32 0.0, %v1480
        %v1482 = vpop.f32.mrb[0].mxu0
        %v1483 = vadd.f32 0.0, %v1482
        %v1484 = vpop.f32.mrb[0].mxu0
        %v1485 = vadd.f32 0.0, %v1484
        %1486 = vdwg.mxu0
        %v1487 = vld [vmem:[%s9] sm:$0xf]
        %v1488 = vld [vmem:[%s9 + $0x4] sm:$0xf]
        %v1491 = vunpack.c.l.b16 %v1487
        %v1492 = vunpack.c.l.b16 %v1488
        %v1493 = vpack.c.b16 %v1492, %v1491
        %v1495 = vsel %vm549, %v1493, 0
        %1497 = vmatprep.subr.bf16.mxu0 0
        %1498 = vmatpush1.bf16.msra.mxu0 %v1332
        %1499 = vmatprep.subr.bf16.mxu0 0
        %1500 = vmatpush1.bf16.msra.mxu0 %v1333
        %1501 = vmatprep.subr.bf16.mxu0 0
        %1502 = vmatpush1.bf16.msra.mxu0 0
        %1503 = vmatprep.subr.bf16.mxu0 0
        %1504 = vmatpush1.bf16.msra.mxu0 0
        %1505 = vmatprep.subr.bf16.mxu0 0
        %1506 = vmatpush1.bf16.msra.mxu0 0
        %1507 = vmatprep.subr.bf16.mxu0 0
        %1508 = vmatpush1.bf16.msra.mxu0 0
        %1509 = vmatprep.subr.bf16.mxu0 0
        %1510 = vmatpush1.bf16.msra.mxu0 0
        %1511 = vmatprep.subr.bf16.mxu0 0
        %1512 = vmatpush1.bf16.msra.mxu0 0
        %1513 = vmatprep.subr.bf16.mxu0 0
        %1514 = vmatpush1.bf16.msra.mxu0 0
        %1515 = vmatprep.subr.bf16.mxu0 0
        %1516 = vmatpush1.bf16.msra.mxu0 0
        %1517 = vmatprep.subr.bf16.mxu0 0
        %1518 = vmatpush1.bf16.msra.mxu0 0
        %1519 = vmatprep.subr.bf16.mxu0 0
        %1520 = vmatpush1.bf16.msra.mxu0 0
        %1521 = vmatprep.subr.bf16.mxu0 0
        %1522 = vmatpush1.bf16.msra.mxu0 0
        %1523 = vmatprep.subr.bf16.mxu0 0
        %1524 = vmatpush1.bf16.msra.mxu0 0
        %1525 = vmatprep.subr.bf16.mxu0 0
        %1526 = vmatpush1.bf16.msra.mxu0 0
        %1527 = vmatprep.subr.bf16.mxu0 0
        %1528 = vmatpush1.bf16.msra.mxu0 0
        %1529 = vmatprep.mubr.bf16.mxu0 0
        %1530 = vmatmul.mubr.bf16.gmra.mrb[0].mxu0 %v1495
        %v1531 = vpop.f32.mrb[0].mxu0
        %v1532 = vadd.f32 0.0, %v1531
        %v1533 = vpop.f32.mrb[0].mxu0
        %v1534 = vpop.f32.mrb[0].mxu0
        %v1535 = vadd.f32 0.0, %v1534
        %v1536 = vpop.f32.mrb[0].mxu0
        %1537 = vdwg.mxu0
        %v1538 = vpack.c.bf16 %v1535, %v1532
        %v1539 = vpack.c.bf16 %v1413, %v1409
        %v1540 = vpack.c.bf16 %v1415, %v1411
        %v1541 = vpack.c.bf16 %v1423, %v1419
        %v1542 = vpack.c.bf16 %v1425, %v1421
        %v1543 = vpack.c.bf16 %v1433, %v1429
        %v1544 = vpack.c.bf16 %v1435, %v1431
        %v1545 = vpack.c.bf16 %v1443, %v1439
        %v1546 = vpack.c.bf16 %v1445, %v1441
        %v1547 = vpack.c.bf16 %v1453, %v1449
        %v1548 = vpack.c.bf16 %v1455, %v1451
        %v1549 = vpack.c.bf16 %v1463, %v1459
        %v1550 = vpack.c.bf16 %v1465, %v1461
        %v1551 = vpack.c.bf16 %v1473, %v1469
        %v1552 = vpack.c.bf16 %v1475, %v1471
        %v1553 = vpack.c.bf16 %v1483, %v1479
        %v1554 = vpack.c.bf16 %v1485, %v1481
        %1555 = vst [vmem:[#allocation2] sm:$0xff] %v1262
        %1556 = vst [vmem:[#allocation2 + $0x8] sm:$0xff] %v1538
        %v1557 = vld [vmem:[%s10] sm:$0xf]
        %v1558 = vld [vmem:[%s10 + $0x4] sm:$0xf]
        %v1561 = vunpack.c.l.b16 %v1557
        %v1562 = vunpack.c.l.b16 %v1558
        %v1563 = vpack.c.b16 %v1562, %v1561
        %1565 = vst.msk [vmem:[#allocation2 + $0x10] sm:$0xff] %vm549, %v1563
        %1566 = vst [vmem:[#allocation3] sm:$0xff] %v1263
        %1567 = vst [vmem:[#allocation3 + $0x8] sm:$0xff] %v1264
        %1568 = vst [vmem:[#allocation3 + $0x10] sm:$0xff] %v1265
        %1569 = vst [vmem:[#allocation3 + $0x18] sm:$0xff] %v1266
        %1570 = vst [vmem:[#allocation3 + $0x20] sm:$0xff] %v1267
        %1571 = vst [vmem:[#allocation3 + $0x28] sm:$0xff] %v1268
        %1572 = vst [vmem:[#allocation3 + $0x30] sm:$0xff] %v1269
        %1573 = vst [vmem:[#allocation3 + $0x38] sm:$0xff] %v1270
        %1574 = vst [vmem:[#allocation3 + $0x40] sm:$0xff] %v1271
        %1575 = vst [vmem:[#allocation3 + $0x48] sm:$0xff] %v1272
        %1576 = vst [vmem:[#allocation3 + $0x50] sm:$0xff] %v1273
        %1577 = vst [vmem:[#allocation3 + $0x58] sm:$0xff] %v1274
        %1578 = vst [vmem:[#allocation3 + $0x60] sm:$0xff] %v1275
        %1579 = vst [vmem:[#allocation3 + $0x68] sm:$0xff] %v1276
        %1580 = vst [vmem:[#allocation3 + $0x70] sm:$0xff] %v1277
        %1581 = vst [vmem:[#allocation3 + $0x78] sm:$0xff] %v1278
        %1582 = vst [vmem:[#allocation3 + $0x80] sm:$0xff] %v1539
        %1583 = vst [vmem:[#allocation3 + $0x88] sm:$0xff] %v1540
        %1584 = vst [vmem:[#allocation3 + $0x90] sm:$0xff] %v1541
        %1585 = vst [vmem:[#allocation3 + $0x98] sm:$0xff] %v1542
        %1586 = vst [vmem:[#allocation3 + $0xa0] sm:$0xff] %v1543
        %1587 = vst [vmem:[#allocation3 + $0xa8] sm:$0xff] %v1544
        %1588 = vst [vmem:[#allocation3 + $0xb0] sm:$0xff] %v1545
        %1589 = vst [vmem:[#allocation3 + $0xb8] sm:$0xff] %v1546
        %1590 = vst [vmem:[#allocation3 + $0xc0] sm:$0xff] %v1547
        %1591 = vst [vmem:[#allocation3 + $0xc8] sm:$0xff] %v1548
        %1592 = vst [vmem:[#allocation3 + $0xd0] sm:$0xff] %v1549
        %1593 = vst [vmem:[#allocation3 + $0xd8] sm:$0xff] %v1550
        %1594 = vst [vmem:[#allocation3 + $0xe0] sm:$0xff] %v1551
        %1595 = vst [vmem:[#allocation3 + $0xe8] sm:$0xff] %v1552
        %1596 = vst [vmem:[#allocation3 + $0xf0] sm:$0xff] %v1553
        %1597 = vst [vmem:[#allocation3 + $0xf8] sm:$0xff] %v1554
        %v1598 = vpack.c.bf16 %v779, %v777
        %v1599 = vpack.c.bf16 %v780, %v778
        %v1600 = vpack.c.bf16 %v783, %v781
        %v1601 = vpack.c.bf16 %v784, %v782
        %1602 = vst [vmem:[#allocation3 + $0x100] sm:$0xff] %v1598
        %1603 = vst [vmem:[#allocation3 + $0x108] sm:$0xff] %v1599
        %1604 = vst [vmem:[#allocation3 + $0x110] sm:$0xff] %v1600
        %1605 = vst [vmem:[#allocation3 + $0x118] sm:$0xff] %v1601
        %v1606 = vld [vmem:[#allocation2] sm:$0xff]
        %v1607 = vld [vmem:[#allocation2 + $0x8] sm:$0xff]
        %v1608 = vld [vmem:[#allocation2 + $0x10] sm:$0xff]
        %v1609 = vld [vmem:[#allocation3] sm:$0xff]
        %v1610 = vld [vmem:[#allocation3 + $0x8] sm:$0xff]
        %v1611 = vld [vmem:[#allocation3 + $0x10] sm:$0xff]
        %v1612 = vld [vmem:[#allocation3 + $0x18] sm:$0xff]
        %v1613 = vld [vmem:[#allocation3 + $0x20] sm:$0xff]
        %v1614 = vld [vmem:[#allocation3 + $0x28] sm:$0xff]
        %v1615 = vld [vmem:[#allocation3 + $0x30] sm:$0xff]
        %v1616 = vld [vmem:[#allocation3 + $0x38] sm:$0xff]
        %v1617 = vld [vmem:[#allocation3 + $0x40] sm:$0xff]
        %v1618 = vld [vmem:[#allocation3 + $0x48] sm:$0xff]
        %v1619 = vld [vmem:[#allocation3 + $0x50] sm:$0xff]
        %v1620 = vld [vmem:[#allocation3 + $0x58] sm:$0xff]
        %v1621 = vld [vmem:[#allocation3 + $0x60] sm:$0xff]
        %v1622 = vld [vmem:[#allocation3 + $0x68] sm:$0xff]
        %v1623 = vld [vmem:[#allocation3 + $0x70] sm:$0xff]
        %v1624 = vld [vmem:[#allocation3 + $0x78] sm:$0xff]
        %v1625 = vld [vmem:[#allocation3 + $0x80] sm:$0xff]
        %v1626 = vld [vmem:[#allocation3 + $0x88] sm:$0xff]
        %v1627 = vld [vmem:[#allocation3 + $0x90] sm:$0xff]
        %v1628 = vld [vmem:[#allocation3 + $0x98] sm:$0xff]
        %v1629 = vld [vmem:[#allocation3 + $0xa0] sm:$0xff]
        %v1630 = vld [vmem:[#allocation3 + $0xa8] sm:$0xff]
        %v1631 = vld [vmem:[#allocation3 + $0xb0] sm:$0xff]
        %v1632 = vld [vmem:[#allocation3 + $0xb8] sm:$0xff]
        %v1633 = vld [vmem:[#allocation3 + $0xc0] sm:$0xff]
        %v1634 = vld [vmem:[#allocation3 + $0xc8] sm:$0xff]
        %v1635 = vld [vmem:[#allocation3 + $0xd0] sm:$0xff]
        %v1636 = vld [vmem:[#allocation3 + $0xd8] sm:$0xff]
        %v1637 = vld [vmem:[#allocation3 + $0xe0] sm:$0xff]
        %v1638 = vld [vmem:[#allocation3 + $0xe8] sm:$0xff]
        %v1639 = vld [vmem:[#allocation3 + $0xf0] sm:$0xff]
        %v1640 = vld [vmem:[#allocation3 + $0xf8] sm:$0xff]
        %v1641 = vld [vmem:[#allocation3 + $0x100] sm:$0xff]
        %v1642 = vld [vmem:[#allocation3 + $0x108] sm:$0xff]
        %v1643 = vld [vmem:[#allocation3 + $0x110] sm:$0xff]
        %v1644 = vld [vmem:[#allocation3 + $0x118] sm:$0xff]
        %v1645 = vld [vmem:[%s11] sm:$0xff]
        %v1646 = vld [vmem:[%s11 + $0x8] sm:$0xff]
        %1648 = vset.pattern.permute.xlu0 0
        %1649 = vperm.xlu0 %1648, %v1645
        %v1650 = vpop.permute.xlu0 %1649
        %1653 = vset.pattern.permute.xlu0 0
        %1654 = vperm.xlu0 %1653, %v1646
        %v1655 = vpop.permute.xlu0 %1654
        %v1658 = vsel %vm549, %v1608, 0
        %1660 = vmatprep.subr.bf16.mxu0 %v1610
        %1661 = vmatpush1.bf16.msra.mxu0 %v1609
        %1662 = vmatprep.subr.bf16.mxu0 %v1612
        %1663 = vmatpush1.bf16.msra.mxu0 %v1611
        %1664 = vmatprep.subr.bf16.mxu0 %v1614
        %1665 = vmatpush1.bf16.msra.mxu0 %v1613
        %1666 = vmatprep.subr.bf16.mxu0 %v1616
        %1667 = vmatpush1.bf16.msra.mxu0 %v1615
        %1668 = vmatprep.subr.bf16.mxu0 %v1618
        %1669 = vmatpush1.bf16.msra.mxu0 %v1617
        %1670 = vmatprep.subr.bf16.mxu0 %v1620
        %1671 = vmatpush1.bf16.msra.mxu0 %v1619
        %1672 = vmatprep.subr.bf16.mxu0 %v1622
        %1673 = vmatpush1.bf16.msra.mxu0 %v1621
        %1674 = vmatprep.subr.bf16.mxu0 %v1624
        %1675 = vmatpush1.bf16.msra.mxu0 %v1623
        %1676 = vmatprep.subr.bf16.mxu0 %v1626
        %1677 = vmatpush1.bf16.msra.mxu0 %v1625
        %1678 = vmatprep.subr.bf16.mxu0 %v1628
        %1679 = vmatpush1.bf16.msra.mxu0 %v1627
        %1680 = vmatprep.subr.bf16.mxu0 %v1630
        %1681 = vmatpush1.bf16.msra.mxu0 %v1629
        %1682 = vmatprep.subr.bf16.mxu0 %v1632
        %1683 = vmatpush1.bf16.msra.mxu0 %v1631
        %1684 = vmatprep.subr.bf16.mxu0 %v1634
        %1685 = vmatpush1.bf16.msra.mxu0 %v1633
        %1686 = vmatprep.subr.bf16.mxu0 %v1636
        %1687 = vmatpush1.bf16.msra.mxu0 %v1635
        %1688 = vmatprep.subr.bf16.mxu0 %v1638
        %1689 = vmatpush1.bf16.msra.mxu0 %v1637
        %1690 = vmatprep.subr.bf16.mxu0 %v1640
        %1691 = vmatpush1.bf16.msra.mxu0 %v1639
        %1692 = vmatprep.mubr.bf16.mxu0 %v1607
        %1693 = vmatmul.mubr.bf16.gmra.mrb[0].mxu0 %v1606
        %v1694 = vpop.f32.mrb[0].mxu0
        %v1695 = vadd.f32 %v1650, %v1694
        %v1696 = vpop.f32.mrb[0].mxu0
        %v1697 = vadd.f32 %v1650, %v1696
        %v1698 = vpop.f32.mrb[0].mxu0
        %v1699 = vadd.f32 %v1655, %v1698
        %v1700 = vpop.f32.mrb[0].mxu0
        %v1701 = vadd.f32 %v1655, %v1700
        %1702 = vdwg.mxu0
        %1703 = vmatprep.subr.bf16.mxu0 %v1642
        %1704 = vmatpush1.bf16.msra.mxu0 %v1641
        %1705 = vmatprep.subr.bf16.mxu0 %v1644
        %1706 = vmatpush1.bf16.msra.mxu0 %v1643
        %1707 = vmatprep.subr.bf16.mxu0 0
        %1708 = vmatpush1.bf16.msra.mxu0 0
        %1709 = vmatprep.subr.bf16.mxu0 0
        %1710 = vmatpush1.bf16.msra.mxu0 0
        %1711 = vmatprep.subr.bf16.mxu0 0
        %1712 = vmatpush1.bf16.msra.mxu0 0
        %1713 = vmatprep.subr.bf16.mxu0 0
        %1714 = vmatpush1.bf16.msra.mxu0 0
        %1715 = vmatprep.subr.bf16.mxu0 0
        %1716 = vmatpush1.bf16.msra.mxu0 0
        %1717 = vmatprep.subr.bf16.mxu0 0
        %1718 = vmatpush1.bf16.msra.mxu0 0
        %1719 = vmatprep.subr.bf16.mxu0 0
        %1720 = vmatpush1.bf16.msra.mxu0 0
        %1721 = vmatprep.subr.bf16.mxu0 0
        %1722 = vmatpush1.bf16.msra.mxu0 0
        %1723 = vmatprep.subr.bf16.mxu0 0
        %1724 = vmatpush1.bf16.msra.mxu0 0
        %1725 = vmatprep.subr.bf16.mxu0 0
        %1726 = vmatpush1.bf16.msra.mxu0 0
        %1727 = vmatprep.subr.bf16.mxu0 0
        %1728 = vmatpush1.bf16.msra.mxu0 0
        %1729 = vmatprep.subr.bf16.mxu0 0
        %1730 = vmatpush1.bf16.msra.mxu0 0
        %1731 = vmatprep.subr.bf16.mxu0 0
        %1732 = vmatpush1.bf16.msra.mxu0 0
        %1733 = vmatprep.subr.bf16.mxu0 0
        %1734 = vmatpush1.bf16.msra.mxu0 0
        %1735 = vmatprep.mubr.bf16.mxu0 0
        %1736 = vmatmul.mubr.bf16.gmra.mrb[0].mxu0 %v1658
        %v1737 = vpop.f32.mrb[0].mxu0
        %v1738 = vadd.f32 %v1695, %v1737
        %v1739 = vpop.f32.mrb[0].mxu0
        %v1740 = vadd.f32 %v1697, %v1739
        %v1741 = vpop.f32.mrb[0].mxu0
        %v1742 = vadd.f32 %v1699, %v1741
        %v1743 = vpop.f32.mrb[0].mxu0
        %v1744 = vadd.f32 %v1701, %v1743
        %1745 = vdwg.mxu0
        %v1746 = vmax.f32 %v1738, 0.0
        %v1747 = vmax.f32 %v1740, 0.0
        %v1748 = vmax.f32 %v1742, 0.0
        %v1749 = vmax.f32 %v1744, 0.0
        %1750 = vst [vmem:[%s457] sm:$0xff] %v1746
        %1751 = vst [vmem:[%s457 + $0x8] sm:$0xff] %v1747
        %1752 = vst [vmem:[%s457 + $0x10] sm:$0xff] %v1748
        %1753 = vst [vmem:[%s457 + $0x18] sm:$0xff] %v1749
        %s1754 = sand.u32 %s317, 1
        %s1755 = scalar_lea.sflag [#allocation5], %s1754
        %s1756 = sand.u32 %s317, 1
        %s1757 = smul.addr %s1756, 32
        %s1758 = scalar_lea.vmem [#allocation4], %s1757
        // Predicated region
        $region69: #{tpu_custom_call.1} parent=67 // pred_check
          %p1759 = pneg %p327
        $region70: #{tpu_custom_call.1} parent=67 // pred_check_branch
          %1761 = sbr.rel (%p1759) target = $region72
        $region71: #{tpu_custom_call.1} parent=67 // pred_region
          %s1762 = smul.u32 2, %s31
          %s1764 = ssub.s32 512, 512
          %1765 = vsyncadd %s1755, %s1764
          %s1766 = smul.addr %s30, 4
          %s1767 = sadd.s32 %s1762, %s1766
          %s1768 = smul.addr %s1767, 128
          %s1769 = scalar_lea.hbm %s12, %s1768
          %s1770 = sshll.u32 %s1758, 4
          %s1771 = int_to_ptr.vmem [resolvable:$true] %s1770
          %1776 = dma.vmem_to_hbm [thread:$0]  %s1771, 512, %s1769, %s1755, 256, 256, 16
        $region72: #{tpu_custom_call.1} parent=67 // pred_fallthru
          _
      $region68: #{tpu_custom_call.1} parent=5 // pred_fallthru
        _
      %p1777 = scmp.le.s32.totalorder 2, %s21
      // Predicated region
      $region73: #{tpu_custom_call.1} parent=5 // pred_check
        %p1778 = pneg %p1777
      $region74: #{tpu_custom_call.1} parent=5 // pred_check_branch
        %1780 = sbr.rel (%p1778) target = $region76
      $region75: #{tpu_custom_call.1} parent=5 // pred_region
        %s1781 = ssub.s32 %s21, 2
        // Predicated region
        $region77: #{tpu_custom_call.1} parent=75 // pred_check
          %p1782 = pneg %p333
        $region78: #{tpu_custom_call.1} parent=75 // pred_check_branch
          %1784 = sbr.rel (%p1782) target = $region80
        $region79: #{tpu_custom_call.1} parent=75 // pred_region
          %s1785 = sand.u32 %s318, 1
          %s1786 = scalar_lea.sflag [#allocation5], %s1785
          %s1787 = sand.u32 %s318, 1
          %s1788 = smul.addr %s1787, 32
          %s1789 = scalar_lea.vmem [#allocation4], %s1788
          %1790 = dma.done %s1786, 512
        $region80: #{tpu_custom_call.1} parent=75 // pred_fallthru
          _
      $region76: #{tpu_custom_call.1} parent=5 // pred_fallthru
        _
    $region6: #{tpu_custom_call.1} parent=1 // loop_footer
      %s25 = sadd.s32 1, %s21
    $region7: #{tpu_custom_call.1} parent=1 // loop_footer_branch
      %20 = sbr.rel target = $region3
    $region8: #{tpu_custom_call.1} parent=1 // loop_exit
      _
    %1791 = vsyncpa [#allocation5], 1
    %s1792 = scalar_lea.sflag [#allocation5], 1
    %1793 = vsyncpa %s1792, 1

</llo_original>
